<compile_context>
chip_gen: v7x
topology: tpu7x:2x2x1
jax: 0.10.0
libtpu: 0.0.40
codegen_flags: <defaults>
</compile_context>

<pallas_src>
import jax
import jax.numpy as jnp
from jax.experimental import pallas as pl
from jax.experimental.pallas import tpu as pltpu


def _gamma_kernel(x_ref, e_ref, a_ref, r_ref, norm_ref, out_ref):
    """out[n, f*M + m] = a[f,m]*log(x[n,f]) - r[f,m]*x[n,f] + norm[f,m].

    Shapes (all lane-dense):
      x_ref    : (tile_n, F)     input rows, native dtype (cast to f32 here)
      e_ref    : (F, F*M)        one-hot expansion, E[f, f*M+m] = 1
      a_ref    : (1, F*M)        concentration - 1, flattened
      r_ref    : (1, F*M)        rate, flattened
      norm_ref : (1, F*M)        c*log(r) - lgamma(c), flattened (precomputed)
      out_ref  : (tile_n, F*M)   log-probs, full-width stores
    """
    x = x_ref[...].astype(jnp.float32)          # cast in-kernel (free on VPU)
    lx = jnp.log(x)                             # one EUP log per (n, f) only

    e = e_ref[...]
    # Replicate x / log(x) across the multiplicity axis on the otherwise-idle
    # MXU.  E is one-hot (0/1), HIGHEST precision keeps full f32 fidelity.
    xe = jnp.dot(x, e, preferred_element_type=jnp.float32,
                 precision=jax.lax.Precision.HIGHEST)       # (tile_n, F*M)
    lxe = jnp.dot(lx, e, preferred_element_type=jnp.float32,
                  precision=jax.lax.Precision.HIGHEST)      # (tile_n, F*M)

    # Lane-dense FMAs; (1, F*M) params sublane-broadcast over the batch rows.
    res = lxe * a_ref[...] - xe * r_ref[...] + norm_ref[...]
    out_ref[...] = res.astype(out_ref.dtype)


def _pick_tile_n(n, f, m, in_bytes, out_bytes, budget, cap=1024):
    """Largest batch tile fitting the VMEM budget (double-buffered pipeline)."""
    fm = f * m
    # Resident / step-invariant buffers (counted double-buffered to be safe):
    fixed = 2 * f * fm * 4 + 2 * 3 * fm * 4
    def cost(t):
        return (fixed
                + 2 * t * f * in_bytes          # double-buffered x tile
                + 2 * t * fm * out_bytes        # double-buffered output tile
                + 3 * t * fm * 4                # f32 temporaries (xe, lxe, res)
                + 2 * t * f * 4)                # f32 temporaries (x, lx)
    if n <= cap and cost(n) <= budget:
        return n                                # whole batch in one block
    # Multiple-of-8 tiles; the partial last block is masked by Pallas.
    t = max(8, (min(cap, n) // 8) * 8)
    while t > 8 and cost(t) > budget:
        t -= 8
    return t


def gamma_log_prob(x, concentration, rate, *, out_dtype=jnp.bfloat16):
    """Pallas forward pass of the torchspn `Gamma` leaf layer.

    out[n, f, m] = Gamma(concentration[f, m], rate[f, m]).log_prob(x[n, f])

    Args:
      x:             [N, F] inputs (Gamma support: x > 0).
      concentration: [F, M] Gamma concentration parameters.
      rate:          [F, M] Gamma rate parameters.
      out_dtype:     output dtype.  Defaults to bfloat16 because the kernel is
                     writeback-bound (output is M x larger than the input);
                     math stays f32, only the final store is cast.  Pass
                     jnp.float32 for bit-faithful torch semantics.

    Returns:
      [N, F, M] log-probabilities.
    """
    n, f = x.shape
    f2, m = concentration.shape
    assert f2 == f and rate.shape == (f, m)
    out_dtype = jnp.dtype(out_dtype)
    fm = f * m

    # ---- parameter-only math hoisted out of the kernel ([F, M]-sized) ----
    c = concentration.astype(jnp.float32)
    r = rate.astype(jnp.float32)
    a_flat = (c - 1.0).reshape(1, fm)
    r_flat = r.reshape(1, fm)
    norm_flat = (c * jnp.log(r) - jax.lax.lgamma(c)).reshape(1, fm)

    # One-hot expansion E[f, f*M + m] = 1: replicates per-feature values across
    # the multiplicity axis via a matmul so the output stays lane-dense.
    expand = jnp.repeat(jnp.eye(f, dtype=jnp.float32), m, axis=1)   # (F, F*M)

    # ---- VMEM budget / tiling ----
    try:
        vmem_cap = pltpu.get_tpu_info().vmem_capacity_bytes
    except Exception:  # interpret mode / non-TPU backend
        vmem_cap = 64 * 1024 * 1024
    # ~46 MiB on v7x (64 MiB physical per TC), 64 MiB on v5e/v6e (128 MiB).
    vmem_limit = min(int(vmem_cap * 0.72), 64 * 1024 * 1024)
    tile_n = _pick_tile_n(n, f, m, x.dtype.itemsize, out_dtype.itemsize,
                          budget=int(vmem_limit * 0.85))
    grid = (pl.cdiv(n, tile_n),)

    cost = pl.CostEstimate(
        flops=4 * n * fm + 4 * n * f * fm,   # elementwise FMAs + expansion matmuls
        transcendentals=n * f,               # one log per input element
        bytes_accessed=(n * f * x.dtype.itemsize
                        + (f * fm + 3 * fm) * 4
                        + n * fm * out_dtype.itemsize),
    )

    out2d = pl.pallas_call(
        _gamma_kernel,
        out_shape=jax.ShapeDtypeStruct((n, fm), out_dtype),
        grid_spec=pltpu.PrefetchScalarGridSpec(
            num_scalar_prefetch=0,
            grid=grid,
            in_specs=[
                # x: streamed over the batch axis, native dtype.
                pl.BlockSpec((tile_n, f), lambda i: (i, 0)),
                # expansion + params: same block every step -> VMEM-resident.
                pl.BlockSpec((f, fm), lambda i: (0, 0)),
                pl.BlockSpec((1, fm), lambda i: (0, 0)),
                pl.BlockSpec((1, fm), lambda i: (0, 0)),
                pl.BlockSpec((1, fm), lambda i: (0, 0)),
            ],
            out_specs=pl.BlockSpec((tile_n, fm), lambda i: (i, 0)),
        ),
        compiler_params=pltpu.CompilerParams(
            # Batch axis is embarrassingly parallel -> megacore sharding.
            # TODO(synk): on v7x verify both TensorCores engage; if not, switch
            # this axis to pltpu.CORE_PARALLEL.
            dimension_semantics=("parallel",),
            vmem_limit_bytes=vmem_limit,
        ),
        cost_estimate=cost,
    )(x, expand, a_flat, r_flat, norm_flat)

    # Contiguous reshape (free) back to the module's [N, F, M] output shape.
    return out2d.reshape(n, f, m)


# TODO(synk): dropout > 0 path (Bernoulli multiplicative mask in Leaf.forward) is not
# implemented; the module defaults to dropout=0.0 where forward is a no-op.
# TODO(synk): torch uses xlogy(c-1, x); the x == 0 with c == 1 boundary is not
# special-cased here (inputs are assumed strictly inside the Gamma support, x > 0).


if __name__ == "__main__":
    key = jax.random.PRNGKey(0)
    k1, k2, k3 = jax.random.split(key, 3)

    # Small shapes consistent with the module: batch N, in_features F, multiplicity M.
    N, F, M = 16, 32, 16
    x = jax.random.uniform(k1, (N, F), jnp.float32, minval=0.1, maxval=3.0)
    concentration = jax.random.uniform(k2, (F, M), jnp.float32, minval=0.5, maxval=2.0)
    rate = jax.random.uniform(k3, (F, M), jnp.float32, minval=0.5, maxval=2.0)

    # Pure-JAX reference of torch.distributions.Gamma(c, r).log_prob(x[..., None])
    cb = concentration[None, :, :]
    rb = rate[None, :, :]
    xv = x[:, :, None]
    ref = cb * jnp.log(rb) + (cb - 1.0) * jnp.log(xv) - rb * xv - jax.lax.lgamma(cb)

    # f32 output path: should match the reference at f32 accuracy.
    out32 = jax.block_until_ready(
        gamma_log_prob(x, concentration, rate, out_dtype=jnp.float32))
    assert out32.shape == (N, F, M) and out32.dtype == jnp.float32
    if not jnp.allclose(out32, ref, atol=1e-4, rtol=1e-4):
        raise SystemExit(
            "f32 mismatch: max abs err %e" % float(jnp.max(jnp.abs(out32 - ref))))

    # Default (bf16) output path: f32 math, bf16 only at the final store.
    outbf = jax.block_until_ready(gamma_log_prob(x, concentration, rate))
    assert outbf.shape == (N, F, M) and outbf.dtype == jnp.bfloat16
    if not jnp.allclose(outbf.astype(jnp.float32), ref, atol=5e-2, rtol=2e-2):
        raise SystemExit(
            "bf16 mismatch: max abs err %e"
            % float(jnp.max(jnp.abs(outbf.astype(jnp.float32) - ref))))

    print("KERNEL_OK")
</pallas_src>

<mosaic_0001>
module attributes {stable_mosaic.version = 11 : i64} {
  func.func @_gamma_kernel(%arg0: i32, %arg1: memref<16x32xf32, #tpu.memory_space<vmem>>, %arg2: memref<32x512xf32, #tpu.memory_space<vmem>>, %arg3: memref<1x512xf32, #tpu.memory_space<vmem>>, %arg4: memref<1x512xf32, #tpu.memory_space<vmem>>, %arg5: memref<1x512xf32, #tpu.memory_space<vmem>>, %arg6: memref<16x512xf32, #tpu.memory_space<vmem>>) attributes {dimension_semantics = [#tpu.dimension_semantics<parallel>], iteration_bounds = array<i64: 1>, scalar_prefetch = 0 : i64, scratch_operands = 0 : i64, tpu.core_type = #tpu.core_type<tc>, window_params = [{transform_indices = @transform_0, window_bounds = array<i64: 16, 32>}, {pipeline_mode = #tpu.pipeline_mode<synchronous>, transform_indices = @transform_1, window_bounds = array<i64: 32, 512>}, {pipeline_mode = #tpu.pipeline_mode<synchronous>, transform_indices = @transform_2, window_bounds = array<i64: 1, 512>}, {pipeline_mode = #tpu.pipeline_mode<synchronous>, transform_indices = @transform_3, window_bounds = array<i64: 1, 512>}, {pipeline_mode = #tpu.pipeline_mode<synchronous>, transform_indices = @transform_4, window_bounds = array<i64: 1, 512>}, {transform_indices = @transform_5, window_bounds = array<i64: 16, 512>}]} {
    %c0 = arith.constant 0 : index
    %c0_0 = arith.constant 0 : index
    %0 = vector.load %arg1[%c0, %c0_0] : memref<16x32xf32, #tpu.memory_space<vmem>>, vector<16x32xf32>
    %1 = math.log %0 : vector<16x32xf32>
    %c0_1 = arith.constant 0 : index
    %c0_2 = arith.constant 0 : index
    %2 = vector.load %arg2[%c0_1, %c0_2] : memref<32x512xf32, #tpu.memory_space<vmem>>, vector<32x512xf32>
    %cst = arith.constant dense<0.000000e+00> : vector<16x512xf32>
    %3 = tpu.matmul %0, %2, %cst {dimension_numbers = #tpu.dot_dimension_numbers<[1], [0], [0], [1], [0, 0, 1, 1], [], []>, precision = #tpu.contract_precision<fp32>} : vector<16x32xf32>, vector<32x512xf32>, vector<16x512xf32> -> vector<16x512xf32>
    %cst_3 = arith.constant dense<0.000000e+00> : vector<16x512xf32>
    %4 = tpu.matmul %1, %2, %cst_3 {dimension_numbers = #tpu.dot_dimension_numbers<[1], [0], [0], [1], [0, 0, 1, 1], [], []>, precision = #tpu.contract_precision<fp32>} : vector<16x32xf32>, vector<32x512xf32>, vector<16x512xf32> -> vector<16x512xf32>
    %c0_4 = arith.constant 0 : index
    %c0_5 = arith.constant 0 : index
    %5 = vector.load %arg3[%c0_4, %c0_5] : memref<1x512xf32, #tpu.memory_space<vmem>>, vector<1x512xf32>
    %6 = vector.broadcast %5 : vector<1x512xf32> to vector<16x512xf32>
    %7 = arith.mulf %4, %6 : vector<16x512xf32>
    %c0_6 = arith.constant 0 : index
    %c0_7 = arith.constant 0 : index
    %8 = vector.load %arg4[%c0_6, %c0_7] : memref<1x512xf32, #tpu.memory_space<vmem>>, vector<1x512xf32>
    %9 = vector.broadcast %8 : vector<1x512xf32> to vector<16x512xf32>
    %10 = arith.mulf %3, %9 : vector<16x512xf32>
    %11 = arith.subf %7, %10 : vector<16x512xf32>
    %c0_8 = arith.constant 0 : index
    %c0_9 = arith.constant 0 : index
    %12 = vector.load %arg5[%c0_8, %c0_9] : memref<1x512xf32, #tpu.memory_space<vmem>>, vector<1x512xf32>
    %13 = vector.broadcast %12 : vector<1x512xf32> to vector<16x512xf32>
    %14 = arith.addf %11, %13 : vector<16x512xf32>
    %c0_10 = arith.constant 0 : index
    %c0_11 = arith.constant 0 : index
    %15 = vector.load %arg6[%c0_10, %c0_11] : memref<16x512xf32, #tpu.memory_space<vmem>>, vector<16x512xf32>
    tpu.vector_store %arg6[%c0_10, %c0_11], %14 {strides = array<i32>} : memref<16x512xf32, #tpu.memory_space<vmem>>, vector<16x512xf32>,
    return
  }
  func.func @transform_0(%arg0: i32) -> (i32, i32) {
    %c0_i32 = arith.constant 0 : i32
    %c0_i32_0 = arith.constant 0 : i32
    return %arg0, %c0_i32 : i32, i32
  }
  func.func @transform_1(%arg0: i32) -> (i32, i32) {
    %c0_i32 = arith.constant 0 : i32
    %c0_i32_0 = arith.constant 0 : i32
    %c0_i32_1 = arith.constant 0 : i32
    return %c0_i32, %c0_i32_0 : i32, i32
  }
  func.func @transform_2(%arg0: i32) -> (i32, i32) {
    %c0_i32 = arith.constant 0 : i32
    %c0_i32_0 = arith.constant 0 : i32
    %c0_i32_1 = arith.constant 0 : i32
    return %c0_i32, %c0_i32_0 : i32, i32
  }
  func.func @transform_3(%arg0: i32) -> (i32, i32) {
    %c0_i32 = arith.constant 0 : i32
    %c0_i32_0 = arith.constant 0 : i32
    %c0_i32_1 = arith.constant 0 : i32
    return %c0_i32, %c0_i32_0 : i32, i32
  }
  func.func @transform_4(%arg0: i32) -> (i32, i32) {
    %c0_i32 = arith.constant 0 : i32
    %c0_i32_0 = arith.constant 0 : i32
    %c0_i32_1 = arith.constant 0 : i32
    return %c0_i32, %c0_i32_0 : i32, i32
  }
  func.func @transform_5(%arg0: i32) -> (i32, i32) {
    %c0_i32 = arith.constant 0 : i32
    %c0_i32_0 = arith.constant 0 : i32
    return %arg0, %c0_i32 : i32, i32
  }
}

</mosaic_0001>

<llo_original>
// kernel: tpu_custom_call.1
$region0: #{tpu_custom_call.1}
  #allocation0 [shape = 'u32[]', space=smem, size = 0x4, offset = 0x4, fixed_abs, tag = 'smem constant byte address 0x4 - core index']
  #allocation1 [shape = 'u32[144,128]{1,0:T(1,128)}', space=vmem, size = 0x12000, scoped, tag = 'internal scratch']
  %s0 = inlined_call_operand.hbm [shape: f32[16,32], index: 0, kind: input, shape index: {}]
  %s1 = inlined_call_operand.hbm [shape: f32[32,512], index: 1, kind: input, shape index: {}]
  %s2 = inlined_call_operand.vmem [shape: f32[1,512], index: 2, kind: input, shape index: {}]
  %s3 = inlined_call_operand.vmem [shape: f32[1,512], index: 3, kind: input, shape index: {}]
  %s4 = inlined_call_operand.vmem [shape: f32[1,512], index: 4, kind: input, shape index: {}]
  %s5 = inlined_call_operand.hbm [shape: f32[16,512], index: 5, kind: output, shape index: {}]
  %s6 = sld [smem:[#allocation0]]
  $region38: #{tpu_custom_call.1} parent=0
    _
  %s8 = ssub.s32 1, %s6
  %s9 = scalar_select 0, %s8, %s6
  $region1: #{tpu_custom_call.1} parent=0
    #allocation2 [shape = 'u8[8192]{0}', space=vmem, size = 0x2000, scoped, tag = 'input window, operand 0, single buffered']
    #allocation3 [shape = 's32[1]{0}', space=sflag, size = 0x4, scoped, tag = 'scoped memory for tpu_custom_call.1']
    #allocation4 [shape = 's32[1]{0}', space=sflag, size = 0x4, scoped, tag = 'scoped memory for tpu_custom_call.1']
    #allocation5 [shape = 'u8[65536]{0}', space=vmem, size = 0x10000, scoped, tag = 'input window, operand 1, single buffered']
    #allocation6 [shape = 's32[1]{0}', space=sflag, size = 0x4, scoped, tag = 'scoped memory for tpu_custom_call.1']
    #allocation7 [shape = 'u8[32768]{0}', space=vmem, size = 0x8000, scoped, tag = 'output window, operand 0, single buffered']
    %10 = vsyncpa [#allocation3], 0
    %11 = vsyncpa [#allocation6], 0
    %12 = vsyncpa [#allocation4], 0
    // Predicated region
    $region2: #{tpu_custom_call.1} parent=1 // pred_check
      _
    $region3: #{tpu_custom_call.1} parent=1 // pred_check_branch
      %14 = sbr.rel (0) target = $region5
    $region4: #{tpu_custom_call.1} parent=1 // pred_region
      %s16 = ssub.s32 256, 256
      %17 = vsyncadd [#allocation3], %s16
      %s18 = sshll.u32 [#allocation2], 4
      %s19 = int_to_ptr.vmem [resolvable:$true] %s18
      %24 = dma.hbm_to_vmem [thread:$0]  %s0, 256, %s19, [#allocation3], 128, 128, 8
    $region5: #{tpu_custom_call.1} parent=1 // pred_fallthru
      _
    // Predicated region
    $region6: #{tpu_custom_call.1} parent=1 // pred_check
      _
    $region7: #{tpu_custom_call.1} parent=1 // pred_check_branch
      %26 = sbr.rel (0) target = $region9
    $region8: #{tpu_custom_call.1} parent=1 // pred_region
      %s28 = ssub.s32 2048, 2048
      %29 = vsyncadd [#allocation6], %s28
      %s30 = sshll.u32 [#allocation5], 4
      %s31 = int_to_ptr.vmem [resolvable:$true] %s30
      %36 = dma.hbm_to_vmem [thread:$0]  %s1, 2048, %s31, [#allocation6], 512, 512, 32
    $region9: #{tpu_custom_call.1} parent=1 // pred_fallthru
      _
    // Predicated region
    $region10: #{tpu_custom_call.1} parent=1 // pred_check
      _
    $region11: #{tpu_custom_call.1} parent=1 // pred_check_branch
      %38 = sbr.rel (0) target = $region13
    $region12: #{tpu_custom_call.1} parent=1 // pred_region
      _
    $region13: #{tpu_custom_call.1} parent=1 // pred_fallthru
      _
    // Predicated region
    $region14: #{tpu_custom_call.1} parent=1 // pred_check
      _
    $region15: #{tpu_custom_call.1} parent=1 // pred_check_branch
      %40 = sbr.rel (0) target = $region17
    $region16: #{tpu_custom_call.1} parent=1 // pred_region
      _
    $region17: #{tpu_custom_call.1} parent=1 // pred_fallthru
      _
    // Predicated region
    $region18: #{tpu_custom_call.1} parent=1 // pred_check
      _
    $region19: #{tpu_custom_call.1} parent=1 // pred_check_branch
      %42 = sbr.rel (0) target = $region21
    $region20: #{tpu_custom_call.1} parent=1 // pred_region
      _
    $region21: #{tpu_custom_call.1} parent=1 // pred_fallthru
      _
    // Predicated region
    $region22: #{tpu_custom_call.1} parent=1 // pred_check
      _
    $region23: #{tpu_custom_call.1} parent=1 // pred_check_branch
      %44 = sbr.rel (0) target = $region25
    $region24: #{tpu_custom_call.1} parent=1 // pred_region
      %45 = dma.done [#allocation3], 256
    $region25: #{tpu_custom_call.1} parent=1 // pred_fallthru
      _
    // Predicated region
    $region26: #{tpu_custom_call.1} parent=1 // pred_check
      _
    $region27: #{tpu_custom_call.1} parent=1 // pred_check_branch
      %47 = sbr.rel (0) target = $region29
    $region28: #{tpu_custom_call.1} parent=1 // pred_region
      %48 = dma.done [#allocation6], 2048
    $region29: #{tpu_custom_call.1} parent=1 // pred_fallthru
      _
    %v49 = vld [vmem:[#allocation2] sm:$0xff]
    %v50 = vld [vmem:[#allocation2 + $0x8] sm:$0xff]
    %v51 = vlog2.pop %v49
    %v52 = vmul.f32 %v51, 0.6931472
    %v53 = vlog2.pop %v50
    %v54 = vmul.f32 %v53, 0.6931472
    %v55 = vld [vmem:[#allocation5] sm:$0xff]
    %v56 = vld [vmem:[#allocation5 + $0x8] sm:$0xff]
    %v57 = vld [vmem:[#allocation5 + $0x10] sm:$0xff]
    %v58 = vld [vmem:[#allocation5 + $0x18] sm:$0xff]
    %v59 = vld [vmem:[#allocation5 + $0x20] sm:$0xff]
    %v60 = vld [vmem:[#allocation5 + $0x28] sm:$0xff]
    %v61 = vld [vmem:[#allocation5 + $0x30] sm:$0xff]
    %v62 = vld [vmem:[#allocation5 + $0x38] sm:$0xff]
    %v63 = vld [vmem:[#allocation5 + $0x40] sm:$0xff]
    %v64 = vld [vmem:[#allocation5 + $0x48] sm:$0xff]
    %v65 = vld [vmem:[#allocation5 + $0x50] sm:$0xff]
    %v66 = vld [vmem:[#allocation5 + $0x58] sm:$0xff]
    %v67 = vld [vmem:[#allocation5 + $0x60] sm:$0xff]
    %v68 = vld [vmem:[#allocation5 + $0x68] sm:$0xff]
    %v69 = vld [vmem:[#allocation5 + $0x70] sm:$0xff]
    %v70 = vld [vmem:[#allocation5 + $0x78] sm:$0xff]
    %vm71 = vcmask 261120
    %v73 = vsel %vm71, %v49, 0
    %v76 = vsel %vm71, %v50, 0
    %v78 = vand.u32 %v56, 4294901760
    %79 = vmatprep.subr.mxu0 %v78
    %v80 = vand.u32 %v55, 4294901760
    %81 = vmatpush1.msra.mxu0 %v80
    %v82 = vand.u32 %v60, 4294901760
    %83 = vmatprep.subr.mxu0 %v82
    %v84 = vand.u32 %v59, 4294901760
    %85 = vmatpush1.msra.mxu0 %v84
    %v86 = vand.u32 %v64, 4294901760
    %87 = vmatprep.subr.mxu0 %v86
    %v88 = vand.u32 %v63, 4294901760
    %89 = vmatpush1.msra.mxu0 %v88
    %v90 = vand.u32 %v68, 4294901760
    %91 = vmatprep.subr.mxu0 %v90
    %v92 = vand.u32 %v67, 4294901760
    %93 = vmatpush1.msra.mxu0 %v92
    %94 = vmatprep.subr.mxu0 0.0
    %95 = vmatpush1.msra.mxu0 0.0
    %96 = vmatprep.subr.mxu0 0.0
    %97 = vmatpush1.msra.mxu0 0.0
    %98 = vmatprep.subr.mxu0 0.0
    %99 = vmatpush1.msra.mxu0 0.0
    %100 = vmatprep.subr.mxu0 0.0
    %101 = vmatpush1.msra.mxu0 0.0
    %102 = vmatprep.subr.mxu0 0.0
    %103 = vmatpush1.msra.mxu0 0.0
    %104 = vmatprep.subr.mxu0 0.0
    %105 = vmatpush1.msra.mxu0 0.0
    %106 = vmatprep.subr.mxu0 0.0
    %107 = vmatpush1.msra.mxu0 0.0
    %108 = vmatprep.subr.mxu0 0.0
    %109 = vmatpush1.msra.mxu0 0.0
    %110 = vmatprep.subr.mxu0 0.0
    %111 = vmatpush1.msra.mxu0 0.0
    %112 = vmatprep.subr.mxu0 0.0
    %113 = vmatpush1.msra.mxu0 0.0
    %114 = vmatprep.subr.mxu0 0.0
    %115 = vmatpush1.msra.mxu0 0.0
    %116 = vmatprep.subr.mxu0 0.0
    %117 = vmatpush1.msra.mxu0 0.0
    %118 = vmatprep.subr.mxu0 0.0
    %119 = vmatpush1.msra.mxu0 0.0
    %120 = vmatprep.subr.mxu0 0.0
    %121 = vmatpush1.msra.mxu0 0.0
    %122 = vmatprep.subr.mxu0 0.0
    %123 = vmatpush1.msra.mxu0 0.0
    %124 = vmatprep.subr.mxu0 0.0
    %125 = vmatpush1.msra.mxu0 0.0
    %126 = vmatprep.subr.mxu0 0.0
    %127 = vmatpush1.msra.mxu0 0.0
    %128 = vmatprep.subr.mxu0 0.0
    %129 = vmatpush1.msra.mxu0 0.0
    %130 = vmatprep.subr.mxu0 0.0
    %131 = vmatpush1.msra.mxu0 0.0
    %132 = vmatprep.subr.mxu0 0.0
    %133 = vmatpush1.msra.mxu0 0.0
    %134 = vmatprep.subr.mxu0 0.0
    %135 = vmatpush1.msra.mxu0 0.0
    %136 = vmatprep.subr.mxu0 0.0
    %137 = vmatpush1.msra.mxu0 0.0
    %138 = vmatprep.subr.mxu0 0.0
    %139 = vmatpush1.msra.mxu0 0.0
    %140 = vmatprep.subr.mxu0 0.0
    %141 = vmatpush1.msra.mxu0 0.0
    %142 = vmatprep.subr.mxu0 0.0
    %143 = vmatpush1.msra.mxu0 0.0
    %144 = vmatprep.subr.mxu0 0.0
    %145 = vmatpush1.msra.mxu0 0.0
    %146 = vmatprep.subr.mxu0 0.0
    %147 = vmatpush1.msra.mxu0 0.0
    %148 = vmatprep.subr.mxu0 0.0
    %149 = vmatpush1.msra.mxu0 0.0
    %150 = vmatprep.mubr.f32.mxu0 0.0
    %v151 = vand.u32 %v73, 4294901760
    %v152 = vsub.f32 %v73, %v151
    %v153 = vand.u32 %v152, 4294901760
    %v154 = vsub.f32 %v152, %v153
    %v155 = vand.u32 %v154, 4294901760
    %156 = vmatmul.mubr.f32.gmra.mrb[0].mxu0 %v155
    %v157 = vpop.f32.mrb[0].mxu0
    %v158 = vadd.f32 0.0, %v157
    %v159 = vpop.f32.mrb[0].mxu0
    %v160 = vadd.f32 0.0, %v159
    %161 = vmatprep.mubr.f32.mxu0 0.0
    %v162 = vand.u32 %v76, 4294901760
    %v163 = vsub.f32 %v76, %v162
    %v164 = vand.u32 %v163, 4294901760
    %v165 = vsub.f32 %v163, %v164
    %v166 = vand.u32 %v165, 4294901760
    %167 = vmatmul.mubr.f32.gmra.mrb[0].mxu0 %v166
    %v168 = vpop.f32.mrb[0].mxu0
    %v169 = vadd.f32 0.0, %v168
    %v170 = vpop.f32.mrb[0].mxu0
    %v171 = vadd.f32 0.0, %v170
    %172 = vdwg.mxu0
    %v173 = vand.u32 %v56, 4294901760
    %v174 = vsub.f32 %v56, %v173
    %v175 = vand.u32 %v174, 4294901760
    %v176 = vsub.f32 %v174, %v175
    %v177 = vand.u32 %v176, 4294901760
    %178 = vmatprep.subr.mxu0 %v177
    %v179 = vand.u32 %v55, 4294901760
    %v180 = vsub.f32 %v55, %v179
    %v181 = vand.u32 %v180, 4294901760
    %v182 = vsub.f32 %v180, %v181
    %v183 = vand.u32 %v182, 4294901760
    %184 = vmatpush1.msra.mxu0 %v183
    %v185 = vand.u32 %v60, 4294901760
    %v186 = vsub.f32 %v60, %v185
    %v187 = vand.u32 %v186, 4294901760
    %v188 = vsub.f32 %v186, %v187
    %v189 = vand.u32 %v188, 4294901760
    %190 = vmatprep.subr.mxu0 %v189
    %v191 = vand.u32 %v59, 4294901760
    %v192 = vsub.f32 %v59, %v191
    %v193 = vand.u32 %v192, 4294901760
    %v194 = vsub.f32 %v192, %v193
    %v195 = vand.u32 %v194, 4294901760
    %196 = vmatpush1.msra.mxu0 %v195
    %v197 = vand.u32 %v64, 4294901760
    %v198 = vsub.f32 %v64, %v197
    %v199 = vand.u32 %v198, 4294901760
    %v200 = vsub.f32 %v198, %v199
    %v201 = vand.u32 %v200, 4294901760
    %202 = vmatprep.subr.mxu0 %v201
    %v203 = vand.u32 %v63, 4294901760
    %v204 = vsub.f32 %v63, %v203
    %v205 = vand.u32 %v204, 4294901760
    %v206 = vsub.f32 %v204, %v205
    %v207 = vand.u32 %v206, 4294901760
    %208 = vmatpush1.msra.mxu0 %v207
    %v209 = vand.u32 %v68, 4294901760
    %v210 = vsub.f32 %v68, %v209
    %v211 = vand.u32 %v210, 4294901760
    %v212 = vsub.f32 %v210, %v211
    %v213 = vand.u32 %v212, 4294901760
    %214 = vmatprep.subr.mxu0 %v213
    %v215 = vand.u32 %v67, 4294901760
    %v216 = vsub.f32 %v67, %v215
    %v217 = vand.u32 %v216, 4294901760
    %v218 = vsub.f32 %v216, %v217
    %v219 = vand.u32 %v218, 4294901760
    %220 = vmatpush1.msra.mxu0 %v219
    %221 = vmatprep.subr.mxu0 0.0
    %222 = vmatpush1.msra.mxu0 0.0
    %223 = vmatprep.subr.mxu0 0.0
    %224 = vmatpush1.msra.mxu0 0.0
    %225 = vmatprep.subr.mxu0 0.0
    %226 = vmatpush1.msra.mxu0 0.0
    %227 = vmatprep.subr.mxu0 0.0
    %228 = vmatpush1.msra.mxu0 0.0
    %229 = vmatprep.subr.mxu0 0.0
    %230 = vmatpush1.msra.mxu0 0.0
    %231 = vmatprep.subr.mxu0 0.0
    %232 = vmatpush1.msra.mxu0 0.0
    %233 = vmatprep.subr.mxu0 0.0
    %234 = vmatpush1.msra.mxu0 0.0
    %235 = vmatprep.subr.mxu0 0.0
    %236 = vmatpush1.msra.mxu0 0.0
    %237 = vmatprep.subr.mxu0 0.0
    %238 = vmatpush1.msra.mxu0 0.0
    %239 = vmatprep.subr.mxu0 0.0
    %240 = vmatpush1.msra.mxu0 0.0
    %241 = vmatprep.subr.mxu0 0.0
    %242 = vmatpush1.msra.mxu0 0.0
    %243 = vmatprep.subr.mxu0 0.0
    %244 = vmatpush1.msra.mxu0 0.0
    %245 = vmatprep.subr.mxu0 0.0
    %246 = vmatpush1.msra.mxu0 0.0
    %247 = vmatprep.subr.mxu0 0.0
    %248 = vmatpush1.msra.mxu0 0.0
    %249 = vmatprep.subr.mxu0 0.0
    %250 = vmatpush1.msra.mxu0 0.0
    %251 = vmatprep.subr.mxu0 0.0
    %252 = vmatpush1.msra.mxu0 0.0
    %253 = vmatprep.subr.mxu0 0.0
    %254 = vmatpush1.msra.mxu0 0.0
    %255 = vmatprep.subr.mxu0 0.0
    %256 = vmatpush1.msra.mxu0 0.0
    %257 = vmatprep.subr.mxu0 0.0
    %258 = vmatpush1.msra.mxu0 0.0
    %259 = vmatprep.subr.mxu0 0.0
    %260 = vmatpush1.msra.mxu0 0.0
    %261 = vmatprep.subr.mxu0 0.0
    %262 = vmatpush1.msra.mxu0 0.0
    %263 = vmatprep.subr.mxu0 0.0
    %264 = vmatpush1.msra.mxu0 0.0
    %265 = vmatprep.subr.mxu0 0.0
    %266 = vmatpush1.msra.mxu0 0.0
    %267 = vmatprep.subr.mxu0 0.0
    %268 = vmatpush1.msra.mxu0 0.0
    %269 = vmatprep.subr.mxu0 0.0
    %270 = vmatpush1.msra.mxu0 0.0
    %271 = vmatprep.subr.mxu0 0.0
    %272 = vmatpush1.msra.mxu0 0.0
    %273 = vmatprep.subr.mxu0 0.0
    %274 = vmatpush1.msra.mxu0 0.0
    %275 = vmatprep.subr.mxu0 0.0
    %276 = vmatpush1.msra.mxu0 0.0
    %277 = vmatprep.mubr.f32.mxu0 0.0
    %v278 = vand.u32 %v73, 4294901760
    %279 = vmatmul.mubr.f32.gmra.mrb[0].mxu0 %v278
    %v280 = vpop.f32.mrb[0].mxu0
    %v281 = vadd.f32 %v158, %v280
    %v282 = vpop.f32.mrb[0].mxu0
    %v283 = vadd.f32 %v160, %v282
    %284 = vmatprep.mubr.f32.mxu0 0.0
    %v285 = vand.u32 %v76, 4294901760
    %286 = vmatmul.mubr.f32.gmra.mrb[0].mxu0 %v285
    %v287 = vpop.f32.mrb[0].mxu0
    %v288 = vadd.f32 %v169, %v287
    %v289 = vpop.f32.mrb[0].mxu0
    %v290 = vadd.f32 %v171, %v289
    %291 = vdwg.mxu0
    %v292 = vand.u32 %v56, 4294901760
    %v293 = vsub.f32 %v56, %v292
    %294 = vmatprep.subr.mxu0 %v293
    %v295 = vand.u32 %v55, 4294901760
    %v296 = vsub.f32 %v55, %v295
    %297 = vmatpush1.msra.mxu0 %v296
    %v298 = vand.u32 %v60, 4294901760
    %v299 = vsub.f32 %v60, %v298
    %300 = vmatprep.subr.mxu0 %v299
    %v301 = vand.u32 %v59, 4294901760
    %v302 = vsub.f32 %v59, %v301
    %303 = vmatpush1.msra.mxu0 %v302
    %v304 = vand.u32 %v64, 4294901760
    %v305 = vsub.f32 %v64, %v304
    %306 = vmatprep.subr.mxu0 %v305
    %v307 = vand.u32 %v63, 4294901760
    %v308 = vsub.f32 %v63, %v307
    %309 = vmatpush1.msra.mxu0 %v308
    %v310 = vand.u32 %v68, 4294901760
    %v311 = vsub.f32 %v68, %v310
    %312 = vmatprep.subr.mxu0 %v311
    %v313 = vand.u32 %v67, 4294901760
    %v314 = vsub.f32 %v67, %v313
    %315 = vmatpush1.msra.mxu0 %v314
    %316 = vmatprep.subr.mxu0 0.0
    %317 = vmatpush1.msra.mxu0 0.0
    %318 = vmatprep.subr.mxu0 0.0
    %319 = vmatpush1.msra.mxu0 0.0
    %320 = vmatprep.subr.mxu0 0.0
    %321 = vmatpush1.msra.mxu0 0.0
    %322 = vmatprep.subr.mxu0 0.0
    %323 = vmatpush1.msra.mxu0 0.0
    %324 = vmatprep.subr.mxu0 0.0
    %325 = vmatpush1.msra.mxu0 0.0
    %326 = vmatprep.subr.mxu0 0.0
    %327 = vmatpush1.msra.mxu0 0.0
    %328 = vmatprep.subr.mxu0 0.0
    %329 = vmatpush1.msra.mxu0 0.0
    %330 = vmatprep.subr.mxu0 0.0
    %331 = vmatpush1.msra.mxu0 0.0
    %332 = vmatprep.subr.mxu0 0.0
    %333 = vmatpush1.msra.mxu0 0.0
    %334 = vmatprep.subr.mxu0 0.0
    %335 = vmatpush1.msra.mxu0 0.0
    %336 = vmatprep.subr.mxu0 0.0
    %337 = vmatpush1.msra.mxu0 0.0
    %338 = vmatprep.subr.mxu0 0.0
    %339 = vmatpush1.msra.mxu0 0.0
    %340 = vmatprep.subr.mxu0 0.0
    %341 = vmatpush1.msra.mxu0 0.0
    %342 = vmatprep.subr.mxu0 0.0
    %343 = vmatpush1.msra.mxu0 0.0
    %344 = vmatprep.subr.mxu0 0.0
    %345 = vmatpush1.msra.mxu0 0.0
    %346 = vmatprep.subr.mxu0 0.0
    %347 = vmatpush1.msra.mxu0 0.0
    %348 = vmatprep.subr.mxu0 0.0
    %349 = vmatpush1.msra.mxu0 0.0
    %350 = vmatprep.subr.mxu0 0.0
    %351 = vmatpush1.msra.mxu0 0.0
    %352 = vmatprep.subr.mxu0 0.0
    %353 = vmatpush1.msra.mxu0 0.0
    %354 = vmatprep.subr.mxu0 0.0
    %355 = vmatpush1.msra.mxu0 0.0
    %356 = vmatprep.subr.mxu0 0.0
    %357 = vmatpush1.msra.mxu0 0.0
    %358 = vmatprep.subr.mxu0 0.0
    %359 = vmatpush1.msra.mxu0 0.0
    %360 = vmatprep.subr.mxu0 0.0
    %361 = vmatpush1.msra.mxu0 0.0
    %362 = vmatprep.subr.mxu0 0.0
    %363 = vmatpush1.msra.mxu0 0.0
    %364 = vmatprep.subr.mxu0 0.0
    %365 = vmatpush1.msra.mxu0 0.0
    %366 = vmatprep.subr.mxu0 0.0
    %367 = vmatpush1.msra.mxu0 0.0
    %368 = vmatprep.subr.mxu0 0.0
    %369 = vmatpush1.msra.mxu0 0.0
    %370 = vmatprep.subr.mxu0 0.0
    %371 = vmatpush1.msra.mxu0 0.0
    %372 = vmatprep.mubr.f32.mxu0 0.0
    %v373 = vand.u32 %v73, 4294901760
    %v374 = vsub.f32 %v73, %v373
    %375 = vmatmul.mubr.f32.gmra.mrb[0].mxu0 %v374
    %v376 = vpop.f32.mrb[0].mxu0
    %v377 = vadd.f32 %v281, %v376
    %v378 = vpop.f32.mrb[0].mxu0
    %v379 = vadd.f32 %v283, %v378
    %380 = vmatprep.mubr.f32.mxu0 0.0
    %v381 = vand.u32 %v76, 4294901760
    %v382 = vsub.f32 %v76, %v381
    %383 = vmatmul.mubr.f32.gmra.mrb[0].mxu0 %v382
    %v384 = vpop.f32.mrb[0].mxu0
    %v385 = vadd.f32 %v288, %v384
    %v386 = vpop.f32.mrb[0].mxu0
    %v387 = vadd.f32 %v290, %v386
    %388 = vdwg.mxu0
    %v389 = vand.u32 %v56, 4294901760
    %390 = vmatprep.subr.mxu0 %v389
    %v391 = vand.u32 %v55, 4294901760
    %392 = vmatpush1.msra.mxu0 %v391
    %v393 = vand.u32 %v60, 4294901760
    %394 = vmatprep.subr.mxu0 %v393
    %v395 = vand.u32 %v59, 4294901760
    %396 = vmatpush1.msra.mxu0 %v395
    %v397 = vand.u32 %v64, 4294901760
    %398 = vmatprep.subr.mxu0 %v397
    %v399 = vand.u32 %v63, 4294901760
    %400 = vmatpush1.msra.mxu0 %v399
    %v401 = vand.u32 %v68, 4294901760
    %402 = vmatprep.subr.mxu0 %v401
    %v403 = vand.u32 %v67, 4294901760
    %404 = vmatpush1.msra.mxu0 %v403
    %405 = vmatprep.subr.mxu0 0.0
    %406 = vmatpush1.msra.mxu0 0.0
    %407 = vmatprep.subr.mxu0 0.0
    %408 = vmatpush1.msra.mxu0 0.0
    %409 = vmatprep.subr.mxu0 0.0
    %410 = vmatpush1.msra.mxu0 0.0
    %411 = vmatprep.subr.mxu0 0.0
    %412 = vmatpush1.msra.mxu0 0.0
    %413 = vmatprep.subr.mxu0 0.0
    %414 = vmatpush1.msra.mxu0 0.0
    %415 = vmatprep.subr.mxu0 0.0
    %416 = vmatpush1.msra.mxu0 0.0
    %417 = vmatprep.subr.mxu0 0.0
    %418 = vmatpush1.msra.mxu0 0.0
    %419 = vmatprep.subr.mxu0 0.0
    %420 = vmatpush1.msra.mxu0 0.0
    %421 = vmatprep.subr.mxu0 0.0
    %422 = vmatpush1.msra.mxu0 0.0
    %423 = vmatprep.subr.mxu0 0.0
    %424 = vmatpush1.msra.mxu0 0.0
    %425 = vmatprep.subr.mxu0 0.0
    %426 = vmatpush1.msra.mxu0 0.0
    %427 = vmatprep.subr.mxu0 0.0
    %428 = vmatpush1.msra.mxu0 0.0
    %429 = vmatprep.subr.mxu0 0.0
    %430 = vmatpush1.msra.mxu0 0.0
    %431 = vmatprep.subr.mxu0 0.0
    %432 = vmatpush1.msra.mxu0 0.0
    %433 = vmatprep.subr.mxu0 0.0
    %434 = vmatpush1.msra.mxu0 0.0
    %435 = vmatprep.subr.mxu0 0.0
    %436 = vmatpush1.msra.mxu0 0.0
    %437 = vmatprep.subr.mxu0 0.0
    %438 = vmatpush1.msra.mxu0 0.0
    %439 = vmatprep.subr.mxu0 0.0
    %440 = vmatpush1.msra.mxu0 0.0
    %441 = vmatprep.subr.mxu0 0.0
    %442 = vmatpush1.msra.mxu0 0.0
    %443 = vmatprep.subr.mxu0 0.0
    %444 = vmatpush1.msra.mxu0 0.0
    %445 = vmatprep.subr.mxu0 0.0
    %446 = vmatpush1.msra.mxu0 0.0
    %447 = vmatprep.subr.mxu0 0.0
    %448 = vmatpush1.msra.mxu0 0.0
    %449 = vmatprep.subr.mxu0 0.0
    %450 = vmatpush1.msra.mxu0 0.0
    %451 = vmatprep.subr.mxu0 0.0
    %452 = vmatpush1.msra.mxu0 0.0
    %453 = vmatprep.subr.mxu0 0.0
    %454 = vmatpush1.msra.mxu0 0.0
    %455 = vmatprep.subr.mxu0 0.0
    %456 = vmatpush1.msra.mxu0 0.0
    %457 = vmatprep.subr.mxu0 0.0
    %458 = vmatpush1.msra.mxu0 0.0
    %459 = vmatprep.subr.mxu0 0.0
    %460 = vmatpush1.msra.mxu0 0.0
    %461 = vmatprep.mubr.f32.mxu0 0.0
    %v462 = vand.u32 %v73, 4294901760
    %v463 = vsub.f32 %v73, %v462
    %v464 = vand.u32 %v463, 4294901760
    %465 = vmatmul.mubr.f32.gmra.mrb[0].mxu0 %v464
    %v466 = vpop.f32.mrb[0].mxu0
    %v467 = vadd.f32 %v377, %v466
    %v468 = vpop.f32.mrb[0].mxu0
    %v469 = vadd.f32 %v379, %v468
    %470 = vmatprep.mubr.f32.mxu0 0.0
    %v471 = vand.u32 %v76, 4294901760
    %v472 = vsub.f32 %v76, %v471
    %v473 = vand.u32 %v472, 4294901760
    %474 = vmatmul.mubr.f32.gmra.mrb[0].mxu0 %v473
    %v475 = vpop.f32.mrb[0].mxu0
    %v476 = vadd.f32 %v385, %v475
    %v477 = vpop.f32.mrb[0].mxu0
    %v478 = vadd.f32 %v387, %v477
    %479 = vdwg.mxu0
    %v480 = vand.u32 %v56, 4294901760
    %v481 = vsub.f32 %v56, %v480
    %v482 = vand.u32 %v481, 4294901760
    %483 = vmatprep.subr.mxu0 %v482
    %v484 = vand.u32 %v55, 4294901760
    %v485 = vsub.f32 %v55, %v484
    %v486 = vand.u32 %v485, 4294901760
    %487 = vmatpush1.msra.mxu0 %v486
    %v488 = vand.u32 %v60, 4294901760
    %v489 = vsub.f32 %v60, %v488
    %v490 = vand.u32 %v489, 4294901760
    %491 = vmatprep.subr.mxu0 %v490
    %v492 = vand.u32 %v59, 4294901760
    %v493 = vsub.f32 %v59, %v492
    %v494 = vand.u32 %v493, 4294901760
    %495 = vmatpush1.msra.mxu0 %v494
    %v496 = vand.u32 %v64, 4294901760
    %v497 = vsub.f32 %v64, %v496
    %v498 = vand.u32 %v497, 4294901760
    %499 = vmatprep.subr.mxu0 %v498
    %v500 = vand.u32 %v63, 4294901760
    %v501 = vsub.f32 %v63, %v500
    %v502 = vand.u32 %v501, 4294901760
    %503 = vmatpush1.msra.mxu0 %v502
    %v504 = vand.u32 %v68, 4294901760
    %v505 = vsub.f32 %v68, %v504
    %v506 = vand.u32 %v505, 4294901760
    %507 = vmatprep.subr.mxu0 %v506
    %v508 = vand.u32 %v67, 4294901760
    %v509 = vsub.f32 %v67, %v508
    %v510 = vand.u32 %v509, 4294901760
    %511 = vmatpush1.msra.mxu0 %v510
    %512 = vmatprep.subr.mxu0 0.0
    %513 = vmatpush1.msra.mxu0 0.0
    %514 = vmatprep.subr.mxu0 0.0
    %515 = vmatpush1.msra.mxu0 0.0
    %516 = vmatprep.subr.mxu0 0.0
    %517 = vmatpush1.msra.mxu0 0.0
    %518 = vmatprep.subr.mxu0 0.0
    %519 = vmatpush1.msra.mxu0 0.0
    %520 = vmatprep.subr.mxu0 0.0
    %521 = vmatpush1.msra.mxu0 0.0
    %522 = vmatprep.subr.mxu0 0.0
    %523 = vmatpush1.msra.mxu0 0.0
    %524 = vmatprep.subr.mxu0 0.0
    %525 = vmatpush1.msra.mxu0 0.0
    %526 = vmatprep.subr.mxu0 0.0
    %527 = vmatpush1.msra.mxu0 0.0
    %528 = vmatprep.subr.mxu0 0.0
    %529 = vmatpush1.msra.mxu0 0.0
    %530 = vmatprep.subr.mxu0 0.0
    %531 = vmatpush1.msra.mxu0 0.0
    %532 = vmatprep.subr.mxu0 0.0
    %533 = vmatpush1.msra.mxu0 0.0
    %534 = vmatprep.subr.mxu0 0.0
    %535 = vmatpush1.msra.mxu0 0.0
    %536 = vmatprep.subr.mxu0 0.0
    %537 = vmatpush1.msra.mxu0 0.0
    %538 = vmatprep.subr.mxu0 0.0
    %539 = vmatpush1.msra.mxu0 0.0
    %540 = vmatprep.subr.mxu0 0.0
    %541 = vmatpush1.msra.mxu0 0.0
    %542 = vmatprep.subr.mxu0 0.0
    %543 = vmatpush1.msra.mxu0 0.0
    %544 = vmatprep.subr.mxu0 0.0
    %545 = vmatpush1.msra.mxu0 0.0
    %546 = vmatprep.subr.mxu0 0.0
    %547 = vmatpush1.msra.mxu0 0.0
    %548 = vmatprep.subr.mxu0 0.0
    %549 = vmatpush1.msra.mxu0 0.0
    %550 = vmatprep.subr.mxu0 0.0
    %551 = vmatpush1.msra.mxu0 0.0
    %552 = vmatprep.subr.mxu0 0.0
    %553 = vmatpush1.msra.mxu0 0.0
    %554 = vmatprep.subr.mxu0 0.0
    %555 = vmatpush1.msra.mxu0 0.0
    %556 = vmatprep.subr.mxu0 0.0
    %557 = vmatpush1.msra.mxu0 0.0
    %558 = vmatprep.subr.mxu0 0.0
    %559 = vmatpush1.msra.mxu0 0.0
    %560 = vmatprep.subr.mxu0 0.0
    %561 = vmatpush1.msra.mxu0 0.0
    %562 = vmatprep.subr.mxu0 0.0
    %563 = vmatpush1.msra.mxu0 0.0
    %564 = vmatprep.subr.mxu0 0.0
    %565 = vmatpush1.msra.mxu0 0.0
    %566 = vmatprep.subr.mxu0 0.0
    %567 = vmatpush1.msra.mxu0 0.0
    %568 = vmatprep.mubr.f32.mxu0 0.0
    %v569 = vand.u32 %v73, 4294901760
    %570 = vmatmul.mubr.f32.gmra.mrb[0].mxu0 %v569
    %v571 = vpop.f32.mrb[0].mxu0
    %v572 = vadd.f32 %v467, %v571
    %v573 = vpop.f32.mrb[0].mxu0
    %v574 = vadd.f32 %v469, %v573
    %575 = vmatprep.mubr.f32.mxu0 0.0
    %v576 = vand.u32 %v76, 4294901760
    %577 = vmatmul.mubr.f32.gmra.mrb[0].mxu0 %v576
    %v578 = vpop.f32.mrb[0].mxu0
    %v579 = vadd.f32 %v476, %v578
    %v580 = vpop.f32.mrb[0].mxu0
    %v581 = vadd.f32 %v478, %v580
    %582 = vdwg.mxu0
    %v583 = vand.u32 %v56, 4294901760
    %584 = vmatprep.subr.mxu0 %v583
    %v585 = vand.u32 %v55, 4294901760
    %586 = vmatpush1.msra.mxu0 %v585
    %v587 = vand.u32 %v60, 4294901760
    %588 = vmatprep.subr.mxu0 %v587
    %v589 = vand.u32 %v59, 4294901760
    %590 = vmatpush1.msra.mxu0 %v589
    %v591 = vand.u32 %v64, 4294901760
    %592 = vmatprep.subr.mxu0 %v591
    %v593 = vand.u32 %v63, 4294901760
    %594 = vmatpush1.msra.mxu0 %v593
    %v595 = vand.u32 %v68, 4294901760
    %596 = vmatprep.subr.mxu0 %v595
    %v597 = vand.u32 %v67, 4294901760
    %598 = vmatpush1.msra.mxu0 %v597
    %599 = vmatprep.subr.mxu0 0.0
    %600 = vmatpush1.msra.mxu0 0.0
    %601 = vmatprep.subr.mxu0 0.0
    %602 = vmatpush1.msra.mxu0 0.0
    %603 = vmatprep.subr.mxu0 0.0
    %604 = vmatpush1.msra.mxu0 0.0
    %605 = vmatprep.subr.mxu0 0.0
    %606 = vmatpush1.msra.mxu0 0.0
    %607 = vmatprep.subr.mxu0 0.0
    %608 = vmatpush1.msra.mxu0 0.0
    %609 = vmatprep.subr.mxu0 0.0
    %610 = vmatpush1.msra.mxu0 0.0
    %611 = vmatprep.subr.mxu0 0.0
    %612 = vmatpush1.msra.mxu0 0.0
    %613 = vmatprep.subr.mxu0 0.0
    %614 = vmatpush1.msra.mxu0 0.0
    %615 = vmatprep.subr.mxu0 0.0
    %616 = vmatpush1.msra.mxu0 0.0
    %617 = vmatprep.subr.mxu0 0.0
    %618 = vmatpush1.msra.mxu0 0.0
    %619 = vmatprep.subr.mxu0 0.0
    %620 = vmatpush1.msra.mxu0 0.0
    %621 = vmatprep.subr.mxu0 0.0
    %622 = vmatpush1.msra.mxu0 0.0
    %623 = vmatprep.subr.mxu0 0.0
    %624 = vmatpush1.msra.mxu0 0.0
    %625 = vmatprep.subr.mxu0 0.0
    %626 = vmatpush1.msra.mxu0 0.0
    %627 = vmatprep.subr.mxu0 0.0
    %628 = vmatpush1.msra.mxu0 0.0
    %629 = vmatprep.subr.mxu0 0.0
    %630 = vmatpush1.msra.mxu0 0.0
    %631 = vmatprep.subr.mxu0 0.0
    %632 = vmatpush1.msra.mxu0 0.0
    %633 = vmatprep.subr.mxu0 0.0
    %634 = vmatpush1.msra.mxu0 0.0
    %635 = vmatprep.subr.mxu0 0.0
    %636 = vmatpush1.msra.mxu0 0.0
    %637 = vmatprep.subr.mxu0 0.0
    %638 = vmatpush1.msra.mxu0 0.0
    %639 = vmatprep.subr.mxu0 0.0
    %640 = vmatpush1.msra.mxu0 0.0
    %641 = vmatprep.subr.mxu0 0.0
    %642 = vmatpush1.msra.mxu0 0.0
    %643 = vmatprep.subr.mxu0 0.0
    %644 = vmatpush1.msra.mxu0 0.0
    %645 = vmatprep.subr.mxu0 0.0
    %646 = vmatpush1.msra.mxu0 0.0
    %647 = vmatprep.subr.mxu0 0.0
    %648 = vmatpush1.msra.mxu0 0.0
    %649 = vmatprep.subr.mxu0 0.0
    %650 = vmatpush1.msra.mxu0 0.0
    %651 = vmatprep.subr.mxu0 0.0
    %652 = vmatpush1.msra.mxu0 0.0
    %653 = vmatprep.subr.mxu0 0.0
    %654 = vmatpush1.msra.mxu0 0.0
    %655 = vmatprep.mubr.f32.mxu0 0.0
    %v656 = vand.u32 %v73, 4294901760
    %657 = vmatmul.mubr.f32.gmra.mrb[0].mxu0 %v656
    %v658 = vpop.f32.mrb[0].mxu0
    %v659 = vadd.f32 %v572, %v658
    %v660 = vpop.f32.mrb[0].mxu0
    %v661 = vadd.f32 %v574, %v660
    %662 = vmatprep.mubr.f32.mxu0 0.0
    %v663 = vand.u32 %v76, 4294901760
    %664 = vmatmul.mubr.f32.gmra.mrb[0].mxu0 %v663
    %v665 = vpop.f32.mrb[0].mxu0
    %v666 = vadd.f32 %v579, %v665
    %v667 = vpop.f32.mrb[0].mxu0
    %v668 = vadd.f32 %v581, %v667
    %669 = vdwg.mxu0
    %v670 = vand.u32 %v58, 4294901760
    %671 = vmatprep.subr.mxu0 %v670
    %v672 = vand.u32 %v57, 4294901760
    %673 = vmatpush1.msra.mxu0 %v672
    %v674 = vand.u32 %v62, 4294901760
    %675 = vmatprep.subr.mxu0 %v674
    %v676 = vand.u32 %v61, 4294901760
    %677 = vmatpush1.msra.mxu0 %v676
    %v678 = vand.u32 %v66, 4294901760
    %679 = vmatprep.subr.mxu0 %v678
    %v680 = vand.u32 %v65, 4294901760
    %681 = vmatpush1.msra.mxu0 %v680
    %v682 = vand.u32 %v70, 4294901760
    %683 = vmatprep.subr.mxu0 %v682
    %v684 = vand.u32 %v69, 4294901760
    %685 = vmatpush1.msra.mxu0 %v684
    %686 = vmatprep.subr.mxu0 0.0
    %687 = vmatpush1.msra.mxu0 0.0
    %688 = vmatprep.subr.mxu0 0.0
    %689 = vmatpush1.msra.mxu0 0.0
    %690 = vmatprep.subr.mxu0 0.0
    %691 = vmatpush1.msra.mxu0 0.0
    %692 = vmatprep.subr.mxu0 0.0
    %693 = vmatpush1.msra.mxu0 0.0
    %694 = vmatprep.subr.mxu0 0.0
    %695 = vmatpush1.msra.mxu0 0.0
    %696 = vmatprep.subr.mxu0 0.0
    %697 = vmatpush1.msra.mxu0 0.0
    %698 = vmatprep.subr.mxu0 0.0
    %699 = vmatpush1.msra.mxu0 0.0
    %700 = vmatprep.subr.mxu0 0.0
    %701 = vmatpush1.msra.mxu0 0.0
    %702 = vmatprep.subr.mxu0 0.0
    %703 = vmatpush1.msra.mxu0 0.0
    %704 = vmatprep.subr.mxu0 0.0
    %705 = vmatpush1.msra.mxu0 0.0
    %706 = vmatprep.subr.mxu0 0.0
    %707 = vmatpush1.msra.mxu0 0.0
    %708 = vmatprep.subr.mxu0 0.0
    %709 = vmatpush1.msra.mxu0 0.0
    %710 = vmatprep.subr.mxu0 0.0
    %711 = vmatpush1.msra.mxu0 0.0
    %712 = vmatprep.subr.mxu0 0.0
    %713 = vmatpush1.msra.mxu0 0.0
    %714 = vmatprep.subr.mxu0 0.0
    %715 = vmatpush1.msra.mxu0 0.0
    %716 = vmatprep.subr.mxu0 0.0
    %717 = vmatpush1.msra.mxu0 0.0
    %718 = vmatprep.subr.mxu0 0.0
    %719 = vmatpush1.msra.mxu0 0.0
    %720 = vmatprep.subr.mxu0 0.0
    %721 = vmatpush1.msra.mxu0 0.0
    %722 = vmatprep.subr.mxu0 0.0
    %723 = vmatpush1.msra.mxu0 0.0
    %724 = vmatprep.subr.mxu0 0.0
    %725 = vmatpush1.msra.mxu0 0.0
    %726 = vmatprep.subr.mxu0 0.0
    %727 = vmatpush1.msra.mxu0 0.0
    %728 = vmatprep.subr.mxu0 0.0
    %729 = vmatpush1.msra.mxu0 0.0
    %730 = vmatprep.subr.mxu0 0.0
    %731 = vmatpush1.msra.mxu0 0.0
    %732 = vmatprep.subr.mxu0 0.0
    %733 = vmatpush1.msra.mxu0 0.0
    %734 = vmatprep.subr.mxu0 0.0
    %735 = vmatpush1.msra.mxu0 0.0
    %736 = vmatprep.subr.mxu0 0.0
    %737 = vmatpush1.msra.mxu0 0.0
    %738 = vmatprep.subr.mxu0 0.0
    %739 = vmatpush1.msra.mxu0 0.0
    %740 = vmatprep.subr.mxu0 0.0
    %741 = vmatpush1.msra.mxu0 0.0
    %742 = vmatprep.mubr.f32.mxu0 0.0
    %v743 = vand.u32 %v73, 4294901760
    %v744 = vsub.f32 %v73, %v743
    %v745 = vand.u32 %v744, 4294901760
    %v746 = vsub.f32 %v744, %v745
    %v747 = vand.u32 %v746, 4294901760
    %748 = vmatmul.mubr.f32.gmra.mrb[0].mxu0 %v747
    %v749 = vpop.f32.mrb[0].mxu0
    %v750 = vadd.f32 0.0, %v749
    %v751 = vpop.f32.mrb[0].mxu0
    %v752 = vadd.f32 0.0, %v751
    %753 = vmatprep.mubr.f32.mxu0 0.0
    %v754 = vand.u32 %v76, 4294901760
    %v755 = vsub.f32 %v76, %v754
    %v756 = vand.u32 %v755, 4294901760
    %v757 = vsub.f32 %v755, %v756
    %v758 = vand.u32 %v757, 4294901760
    %759 = vmatmul.mubr.f32.gmra.mrb[0].mxu0 %v758
    %v760 = vpop.f32.mrb[0].mxu0
    %v761 = vadd.f32 0.0, %v760
    %v762 = vpop.f32.mrb[0].mxu0
    %v763 = vadd.f32 0.0, %v762
    %764 = vdwg.mxu0
    %v765 = vand.u32 %v58, 4294901760
    %v766 = vsub.f32 %v58, %v765
    %v767 = vand.u32 %v766, 4294901760
    %v768 = vsub.f32 %v766, %v767
    %v769 = vand.u32 %v768, 4294901760
    %770 = vmatprep.subr.mxu0 %v769
    %v771 = vand.u32 %v57, 4294901760
    %v772 = vsub.f32 %v57, %v771
    %v773 = vand.u32 %v772, 4294901760
    %v774 = vsub.f32 %v772, %v773
    %v775 = vand.u32 %v774, 4294901760
    %776 = vmatpush1.msra.mxu0 %v775
    %v777 = vand.u32 %v62, 4294901760
    %v778 = vsub.f32 %v62, %v777
    %v779 = vand.u32 %v778, 4294901760
    %v780 = vsub.f32 %v778, %v779
    %v781 = vand.u32 %v780, 4294901760
    %782 = vmatprep.subr.mxu0 %v781
    %v783 = vand.u32 %v61, 4294901760
    %v784 = vsub.f32 %v61, %v783
    %v785 = vand.u32 %v784, 4294901760
    %v786 = vsub.f32 %v784, %v785
    %v787 = vand.u32 %v786, 4294901760
    %788 = vmatpush1.msra.mxu0 %v787
    %v789 = vand.u32 %v66, 4294901760
    %v790 = vsub.f32 %v66, %v789
    %v791 = vand.u32 %v790, 4294901760
    %v792 = vsub.f32 %v790, %v791
    %v793 = vand.u32 %v792, 4294901760
    %794 = vmatprep.subr.mxu0 %v793
    %v795 = vand.u32 %v65, 4294901760
    %v796 = vsub.f32 %v65, %v795
    %v797 = vand.u32 %v796, 4294901760
    %v798 = vsub.f32 %v796, %v797
    %v799 = vand.u32 %v798, 4294901760
    %800 = vmatpush1.msra.mxu0 %v799
    %v801 = vand.u32 %v70, 4294901760
    %v802 = vsub.f32 %v70, %v801
    %v803 = vand.u32 %v802, 4294901760
    %v804 = vsub.f32 %v802, %v803
    %v805 = vand.u32 %v804, 4294901760
    %806 = vmatprep.subr.mxu0 %v805
    %v807 = vand.u32 %v69, 4294901760
    %v808 = vsub.f32 %v69, %v807
    %v809 = vand.u32 %v808, 4294901760
    %v810 = vsub.f32 %v808, %v809
    %v811 = vand.u32 %v810, 4294901760
    %812 = vmatpush1.msra.mxu0 %v811
    %813 = vmatprep.subr.mxu0 0.0
    %814 = vmatpush1.msra.mxu0 0.0
    %815 = vmatprep.subr.mxu0 0.0
    %816 = vmatpush1.msra.mxu0 0.0
    %817 = vmatprep.subr.mxu0 0.0
    %818 = vmatpush1.msra.mxu0 0.0
    %819 = vmatprep.subr.mxu0 0.0
    %820 = vmatpush1.msra.mxu0 0.0
    %821 = vmatprep.subr.mxu0 0.0
    %822 = vmatpush1.msra.mxu0 0.0
    %823 = vmatprep.subr.mxu0 0.0
    %824 = vmatpush1.msra.mxu0 0.0
    %825 = vmatprep.subr.mxu0 0.0
    %826 = vmatpush1.msra.mxu0 0.0
    %827 = vmatprep.subr.mxu0 0.0
    %828 = vmatpush1.msra.mxu0 0.0
    %829 = vmatprep.subr.mxu0 0.0
    %830 = vmatpush1.msra.mxu0 0.0
    %831 = vmatprep.subr.mxu0 0.0
    %832 = vmatpush1.msra.mxu0 0.0
    %833 = vmatprep.subr.mxu0 0.0
    %834 = vmatpush1.msra.mxu0 0.0
    %835 = vmatprep.subr.mxu0 0.0
    %836 = vmatpush1.msra.mxu0 0.0
    %837 = vmatprep.subr.mxu0 0.0
    %838 = vmatpush1.msra.mxu0 0.0
    %839 = vmatprep.subr.mxu0 0.0
    %840 = vmatpush1.msra.mxu0 0.0
    %841 = vmatprep.subr.mxu0 0.0
    %842 = vmatpush1.msra.mxu0 0.0
    %843 = vmatprep.subr.mxu0 0.0
    %844 = vmatpush1.msra.mxu0 0.0
    %845 = vmatprep.subr.mxu0 0.0
    %846 = vmatpush1.msra.mxu0 0.0
    %847 = vmatprep.subr.mxu0 0.0
    %848 = vmatpush1.msra.mxu0 0.0
    %849 = vmatprep.subr.mxu0 0.0
    %850 = vmatpush1.msra.mxu0 0.0
    %851 = vmatprep.subr.mxu0 0.0
    %852 = vmatpush1.msra.mxu0 0.0
    %853 = vmatprep.subr.mxu0 0.0
    %854 = vmatpush1.msra.mxu0 0.0
    %855 = vmatprep.subr.mxu0 0.0
    %856 = vmatpush1.msra.mxu0 0.0
    %857 = vmatprep.subr.mxu0 0.0
    %858 = vmatpush1.msra.mxu0 0.0
    %859 = vmatprep.subr.mxu0 0.0
    %860 = vmatpush1.msra.mxu0 0.0
    %861 = vmatprep.subr.mxu0 0.0
    %862 = vmatpush1.msra.mxu0 0.0
    %863 = vmatprep.subr.mxu0 0.0
    %864 = vmatpush1.msra.mxu0 0.0
    %865 = vmatprep.subr.mxu0 0.0
    %866 = vmatpush1.msra.mxu0 0.0
    %867 = vmatprep.subr.mxu0 0.0
    %868 = vmatpush1.msra.mxu0 0.0
    %869 = vmatprep.mubr.f32.mxu0 0.0
    %v870 = vand.u32 %v73, 4294901760
    %871 = vmatmul.mubr.f32.gmra.mrb[0].mxu0 %v870
    %v872 = vpop.f32.mrb[0].mxu0
    %v873 = vadd.f32 %v750, %v872
    %v874 = vpop.f32.mrb[0].mxu0
    %v875 = vadd.f32 %v752, %v874
    %876 = vmatprep.mubr.f32.mxu0 0.0
    %v877 = vand.u32 %v76, 4294901760
    %878 = vmatmul.mubr.f32.gmra.mrb[0].mxu0 %v877
    %v879 = vpop.f32.mrb[0].mxu0
    %v880 = vadd.f32 %v761, %v879
    %v881 = vpop.f32.mrb[0].mxu0
    %v882 = vadd.f32 %v763, %v881
    %883 = vdwg.mxu0
    %v884 = vand.u32 %v58, 4294901760
    %v885 = vsub.f32 %v58, %v884
    %886 = vmatprep.subr.mxu0 %v885
    %v887 = vand.u32 %v57, 4294901760
    %v888 = vsub.f32 %v57, %v887
    %889 = vmatpush1.msra.mxu0 %v888
    %v890 = vand.u32 %v62, 4294901760
    %v891 = vsub.f32 %v62, %v890
    %892 = vmatprep.subr.mxu0 %v891
    %v893 = vand.u32 %v61, 4294901760
    %v894 = vsub.f32 %v61, %v893
    %895 = vmatpush1.msra.mxu0 %v894
    %v896 = vand.u32 %v66, 4294901760
    %v897 = vsub.f32 %v66, %v896
    %898 = vmatprep.subr.mxu0 %v897
    %v899 = vand.u32 %v65, 4294901760
    %v900 = vsub.f32 %v65, %v899
    %901 = vmatpush1.msra.mxu0 %v900
    %v902 = vand.u32 %v70, 4294901760
    %v903 = vsub.f32 %v70, %v902
    %904 = vmatprep.subr.mxu0 %v903
    %v905 = vand.u32 %v69, 4294901760
    %v906 = vsub.f32 %v69, %v905
    %907 = vmatpush1.msra.mxu0 %v906
    %908 = vmatprep.subr.mxu0 0.0
    %909 = vmatpush1.msra.mxu0 0.0
    %910 = vmatprep.subr.mxu0 0.0
    %911 = vmatpush1.msra.mxu0 0.0
    %912 = vmatprep.subr.mxu0 0.0
    %913 = vmatpush1.msra.mxu0 0.0
    %914 = vmatprep.subr.mxu0 0.0
    %915 = vmatpush1.msra.mxu0 0.0
    %916 = vmatprep.subr.mxu0 0.0
    %917 = vmatpush1.msra.mxu0 0.0
    %918 = vmatprep.subr.mxu0 0.0
    %919 = vmatpush1.msra.mxu0 0.0
    %920 = vmatprep.subr.mxu0 0.0
    %921 = vmatpush1.msra.mxu0 0.0
    %922 = vmatprep.subr.mxu0 0.0
    %923 = vmatpush1.msra.mxu0 0.0
    %924 = vmatprep.subr.mxu0 0.0
    %925 = vmatpush1.msra.mxu0 0.0
    %926 = vmatprep.subr.mxu0 0.0
    %927 = vmatpush1.msra.mxu0 0.0
    %928 = vmatprep.subr.mxu0 0.0
    %929 = vmatpush1.msra.mxu0 0.0
    %930 = vmatprep.subr.mxu0 0.0
    %931 = vmatpush1.msra.mxu0 0.0
    %932 = vmatprep.subr.mxu0 0.0
    %933 = vmatpush1.msra.mxu0 0.0
    %934 = vmatprep.subr.mxu0 0.0
    %935 = vmatpush1.msra.mxu0 0.0
    %936 = vmatprep.subr.mxu0 0.0
    %937 = vmatpush1.msra.mxu0 0.0
    %938 = vmatprep.subr.mxu0 0.0
    %939 = vmatpush1.msra.mxu0 0.0
    %940 = vmatprep.subr.mxu0 0.0
    %941 = vmatpush1.msra.mxu0 0.0
    %942 = vmatprep.subr.mxu0 0.0
    %943 = vmatpush1.msra.mxu0 0.0
    %944 = vmatprep.subr.mxu0 0.0
    %945 = vmatpush1.msra.mxu0 0.0
    %946 = vmatprep.subr.mxu0 0.0
    %947 = vmatpush1.msra.mxu0 0.0
    %948 = vmatprep.subr.mxu0 0.0
    %949 = vmatpush1.msra.mxu0 0.0
    %950 = vmatprep.subr.mxu0 0.0
    %951 = vmatpush1.msra.mxu0 0.0
    %952 = vmatprep.subr.mxu0 0.0
    %953 = vmatpush1.msra.mxu0 0.0
    %954 = vmatprep.subr.mxu0 0.0
    %955 = vmatpush1.msra.mxu0 0.0
    %956 = vmatprep.subr.mxu0 0.0
    %957 = vmatpush1.msra.mxu0 0.0
    %958 = vmatprep.subr.mxu0 0.0
    %959 = vmatpush1.msra.mxu0 0.0
    %960 = vmatprep.subr.mxu0 0.0
    %961 = vmatpush1.msra.mxu0 0.0
    %962 = vmatprep.subr.mxu0 0.0
    %963 = vmatpush1.msra.mxu0 0.0
    %964 = vmatprep.mubr.f32.mxu0 0.0
    %v965 = vand.u32 %v73, 4294901760
    %v966 = vsub.f32 %v73, %v965
    %967 = vmatmul.mubr.f32.gmra.mrb[0].mxu0 %v966
    %v968 = vpop.f32.mrb[0].mxu0
    %v969 = vadd.f32 %v873, %v968
    %v970 = vpop.f32.mrb[0].mxu0
    %v971 = vadd.f32 %v875, %v970
    %972 = vmatprep.mubr.f32.mxu0 0.0
    %v973 = vand.u32 %v76, 4294901760
    %v974 = vsub.f32 %v76, %v973
    %975 = vmatmul.mubr.f32.gmra.mrb[0].mxu0 %v974
    %v976 = vpop.f32.mrb[0].mxu0
    %v977 = vadd.f32 %v880, %v976
    %v978 = vpop.f32.mrb[0].mxu0
    %v979 = vadd.f32 %v882, %v978
    %980 = vdwg.mxu0
    %v981 = vand.u32 %v58, 4294901760
    %982 = vmatprep.subr.mxu0 %v981
    %v983 = vand.u32 %v57, 4294901760
    %984 = vmatpush1.msra.mxu0 %v983
    %v985 = vand.u32 %v62, 4294901760
    %986 = vmatprep.subr.mxu0 %v985
    %v987 = vand.u32 %v61, 4294901760
    %988 = vmatpush1.msra.mxu0 %v987
    %v989 = vand.u32 %v66, 4294901760
    %990 = vmatprep.subr.mxu0 %v989
    %v991 = vand.u32 %v65, 4294901760
    %992 = vmatpush1.msra.mxu0 %v991
    %v993 = vand.u32 %v70, 4294901760
    %994 = vmatprep.subr.mxu0 %v993
    %v995 = vand.u32 %v69, 4294901760
    %996 = vmatpush1.msra.mxu0 %v995
    %997 = vmatprep.subr.mxu0 0.0
    %998 = vmatpush1.msra.mxu0 0.0
    %999 = vmatprep.subr.mxu0 0.0
    %1000 = vmatpush1.msra.mxu0 0.0
    %1001 = vmatprep.subr.mxu0 0.0
    %1002 = vmatpush1.msra.mxu0 0.0
    %1003 = vmatprep.subr.mxu0 0.0
    %1004 = vmatpush1.msra.mxu0 0.0
    %1005 = vmatprep.subr.mxu0 0.0
    %1006 = vmatpush1.msra.mxu0 0.0
    %1007 = vmatprep.subr.mxu0 0.0
    %1008 = vmatpush1.msra.mxu0 0.0
    %1009 = vmatprep.subr.mxu0 0.0
    %1010 = vmatpush1.msra.mxu0 0.0
    %1011 = vmatprep.subr.mxu0 0.0
    %1012 = vmatpush1.msra.mxu0 0.0
    %1013 = vmatprep.subr.mxu0 0.0
    %1014 = vmatpush1.msra.mxu0 0.0
    %1015 = vmatprep.subr.mxu0 0.0
    %1016 = vmatpush1.msra.mxu0 0.0
    %1017 = vmatprep.subr.mxu0 0.0
    %1018 = vmatpush1.msra.mxu0 0.0
    %1019 = vmatprep.subr.mxu0 0.0
    %1020 = vmatpush1.msra.mxu0 0.0
    %1021 = vmatprep.subr.mxu0 0.0
    %1022 = vmatpush1.msra.mxu0 0.0
    %1023 = vmatprep.subr.mxu0 0.0
    %1024 = vmatpush1.msra.mxu0 0.0
    %1025 = vmatprep.subr.mxu0 0.0
    %1026 = vmatpush1.msra.mxu0 0.0
    %1027 = vmatprep.subr.mxu0 0.0
    %1028 = vmatpush1.msra.mxu0 0.0
    %1029 = vmatprep.subr.mxu0 0.0
    %1030 = vmatpush1.msra.mxu0 0.0
    %1031 = vmatprep.subr.mxu0 0.0
    %1032 = vmatpush1.msra.mxu0 0.0
    %1033 = vmatprep.subr.mxu0 0.0
    %1034 = vmatpush1.msra.mxu0 0.0
    %1035 = vmatprep.subr.mxu0 0.0
    %1036 = vmatpush1.msra.mxu0 0.0
    %1037 = vmatprep.subr.mxu0 0.0
    %1038 = vmatpush1.msra.mxu0 0.0
    %1039 = vmatprep.subr.mxu0 0.0
    %1040 = vmatpush1.msra.mxu0 0.0
    %1041 = vmatprep.subr.mxu0 0.0
    %1042 = vmatpush1.msra.mxu0 0.0
    %1043 = vmatprep.subr.mxu0 0.0
    %1044 = vmatpush1.msra.mxu0 0.0
    %1045 = vmatprep.subr.mxu0 0.0
    %1046 = vmatpush1.msra.mxu0 0.0
    %1047 = vmatprep.subr.mxu0 0.0
    %1048 = vmatpush1.msra.mxu0 0.0
    %1049 = vmatprep.subr.mxu0 0.0
    %1050 = vmatpush1.msra.mxu0 0.0
    %1051 = vmatprep.subr.mxu0 0.0
    %1052 = vmatpush1.msra.mxu0 0.0
    %1053 = vmatprep.mubr.f32.mxu0 0.0
    %v1054 = vand.u32 %v73, 4294901760
    %v1055 = vsub.f32 %v73, %v1054
    %v1056 = vand.u32 %v1055, 4294901760
    %1057 = vmatmul.mubr.f32.gmra.mrb[0].mxu0 %v1056
    %v1058 = vpop.f32.mrb[0].mxu0
    %v1059 = vadd.f32 %v969, %v1058
    %v1060 = vpop.f32.mrb[0].mxu0
    %v1061 = vadd.f32 %v971, %v1060
    %1062 = vmatprep.mubr.f32.mxu0 0.0
    %v1063 = vand.u32 %v76, 4294901760
    %v1064 = vsub.f32 %v76, %v1063
    %v1065 = vand.u32 %v1064, 4294901760
    %1066 = vmatmul.mubr.f32.gmra.mrb[0].mxu0 %v1065
    %v1067 = vpop.f32.mrb[0].mxu0
    %v1068 = vadd.f32 %v977, %v1067
    %v1069 = vpop.f32.mrb[0].mxu0
    %v1070 = vadd.f32 %v979, %v1069
    %1071 = vdwg.mxu0
    %v1072 = vand.u32 %v58, 4294901760
    %v1073 = vsub.f32 %v58, %v1072
    %v1074 = vand.u32 %v1073, 4294901760
    %1075 = vmatprep.subr.mxu0 %v1074
    %v1076 = vand.u32 %v57, 4294901760
    %v1077 = vsub.f32 %v57, %v1076
    %v1078 = vand.u32 %v1077, 4294901760
    %1079 = vmatpush1.msra.mxu0 %v1078
    %v1080 = vand.u32 %v62, 4294901760
    %v1081 = vsub.f32 %v62, %v1080
    %v1082 = vand.u32 %v1081, 4294901760
    %1083 = vmatprep.subr.mxu0 %v1082
    %v1084 = vand.u32 %v61, 4294901760
    %v1085 = vsub.f32 %v61, %v1084
    %v1086 = vand.u32 %v1085, 4294901760
    %1087 = vmatpush1.msra.mxu0 %v1086
    %v1088 = vand.u32 %v66, 4294901760
    %v1089 = vsub.f32 %v66, %v1088
    %v1090 = vand.u32 %v1089, 4294901760
    %1091 = vmatprep.subr.mxu0 %v1090
    %v1092 = vand.u32 %v65, 4294901760
    %v1093 = vsub.f32 %v65, %v1092
    %v1094 = vand.u32 %v1093, 4294901760
    %1095 = vmatpush1.msra.mxu0 %v1094
    %v1096 = vand.u32 %v70, 4294901760
    %v1097 = vsub.f32 %v70, %v1096
    %v1098 = vand.u32 %v1097, 4294901760
    %1099 = vmatprep.subr.mxu0 %v1098
    %v1100 = vand.u32 %v69, 4294901760
    %v1101 = vsub.f32 %v69, %v1100
    %v1102 = vand.u32 %v1101, 4294901760
    %1103 = vmatpush1.msra.mxu0 %v1102
    %1104 = vmatprep.subr.mxu0 0.0
    %1105 = vmatpush1.msra.mxu0 0.0
    %1106 = vmatprep.subr.mxu0 0.0
    %1107 = vmatpush1.msra.mxu0 0.0
    %1108 = vmatprep.subr.mxu0 0.0
    %1109 = vmatpush1.msra.mxu0 0.0
    %1110 = vmatprep.subr.mxu0 0.0
    %1111 = vmatpush1.msra.mxu0 0.0
    %1112 = vmatprep.subr.mxu0 0.0
    %1113 = vmatpush1.msra.mxu0 0.0
    %1114 = vmatprep.subr.mxu0 0.0
    %1115 = vmatpush1.msra.mxu0 0.0
    %1116 = vmatprep.subr.mxu0 0.0
    %1117 = vmatpush1.msra.mxu0 0.0
    %1118 = vmatprep.subr.mxu0 0.0
    %1119 = vmatpush1.msra.mxu0 0.0
    %1120 = vmatprep.subr.mxu0 0.0
    %1121 = vmatpush1.msra.mxu0 0.0
    %1122 = vmatprep.subr.mxu0 0.0
    %1123 = vmatpush1.msra.mxu0 0.0
    %1124 = vmatprep.subr.mxu0 0.0
    %1125 = vmatpush1.msra.mxu0 0.0
    %1126 = vmatprep.subr.mxu0 0.0
    %1127 = vmatpush1.msra.mxu0 0.0
    %1128 = vmatprep.subr.mxu0 0.0
    %1129 = vmatpush1.msra.mxu0 0.0
    %1130 = vmatprep.subr.mxu0 0.0
    %1131 = vmatpush1.msra.mxu0 0.0
    %1132 = vmatprep.subr.mxu0 0.0
    %1133 = vmatpush1.msra.mxu0 0.0
    %1134 = vmatprep.subr.mxu0 0.0
    %1135 = vmatpush1.msra.mxu0 0.0
    %1136 = vmatprep.subr.mxu0 0.0
    %1137 = vmatpush1.msra.mxu0 0.0
    %1138 = vmatprep.subr.mxu0 0.0
    %1139 = vmatpush1.msra.mxu0 0.0
    %1140 = vmatprep.subr.mxu0 0.0
    %1141 = vmatpush1.msra.mxu0 0.0
    %1142 = vmatprep.subr.mxu0 0.0
    %1143 = vmatpush1.msra.mxu0 0.0
    %1144 = vmatprep.subr.mxu0 0.0
    %1145 = vmatpush1.msra.mxu0 0.0
    %1146 = vmatprep.subr.mxu0 0.0
    %1147 = vmatpush1.msra.mxu0 0.0
    %1148 = vmatprep.subr.mxu0 0.0
    %1149 = vmatpush1.msra.mxu0 0.0
    %1150 = vmatprep.subr.mxu0 0.0
    %1151 = vmatpush1.msra.mxu0 0.0
    %1152 = vmatprep.subr.mxu0 0.0
    %1153 = vmatpush1.msra.mxu0 0.0
    %1154 = vmatprep.subr.mxu0 0.0
    %1155 = vmatpush1.msra.mxu0 0.0
    %1156 = vmatprep.subr.mxu0 0.0
    %1157 = vmatpush1.msra.mxu0 0.0
    %1158 = vmatprep.subr.mxu0 0.0
    %1159 = vmatpush1.msra.mxu0 0.0
    %1160 = vmatprep.mubr.f32.mxu0 0.0
    %v1161 = vand.u32 %v73, 4294901760
    %1162 = vmatmul.mubr.f32.gmra.mrb[0].mxu0 %v1161
    %v1163 = vpop.f32.mrb[0].mxu0
    %v1164 = vadd.f32 %v1059, %v1163
    %v1165 = vpop.f32.mrb[0].mxu0
    %v1166 = vadd.f32 %v1061, %v1165
    %1167 = vmatprep.mubr.f32.mxu0 0.0
    %v1168 = vand.u32 %v76, 4294901760
    %1169 = vmatmul.mubr.f32.gmra.mrb[0].mxu0 %v1168
    %v1170 = vpop.f32.mrb[0].mxu0
    %v1171 = vadd.f32 %v1068, %v1170
    %v1172 = vpop.f32.mrb[0].mxu0
    %v1173 = vadd.f32 %v1070, %v1172
    %1174 = vdwg.mxu0
    %v1175 = vand.u32 %v58, 4294901760
    %1176 = vmatprep.subr.mxu0 %v1175
    %v1177 = vand.u32 %v57, 4294901760
    %1178 = vmatpush1.msra.mxu0 %v1177
    %v1179 = vand.u32 %v62, 4294901760
    %1180 = vmatprep.subr.mxu0 %v1179
    %v1181 = vand.u32 %v61, 4294901760
    %1182 = vmatpush1.msra.mxu0 %v1181
    %v1183 = vand.u32 %v66, 4294901760
    %1184 = vmatprep.subr.mxu0 %v1183
    %v1185 = vand.u32 %v65, 4294901760
    %1186 = vmatpush1.msra.mxu0 %v1185
    %v1187 = vand.u32 %v70, 4294901760
    %1188 = vmatprep.subr.mxu0 %v1187
    %v1189 = vand.u32 %v69, 4294901760
    %1190 = vmatpush1.msra.mxu0 %v1189
    %1191 = vmatprep.subr.mxu0 0.0
    %1192 = vmatpush1.msra.mxu0 0.0
    %1193 = vmatprep.subr.mxu0 0.0
    %1194 = vmatpush1.msra.mxu0 0.0
    %1195 = vmatprep.subr.mxu0 0.0
    %1196 = vmatpush1.msra.mxu0 0.0
    %1197 = vmatprep.subr.mxu0 0.0
    %1198 = vmatpush1.msra.mxu0 0.0
    %1199 = vmatprep.subr.mxu0 0.0
    %1200 = vmatpush1.msra.mxu0 0.0
    %1201 = vmatprep.subr.mxu0 0.0
    %1202 = vmatpush1.msra.mxu0 0.0
    %1203 = vmatprep.subr.mxu0 0.0
    %1204 = vmatpush1.msra.mxu0 0.0
    %1205 = vmatprep.subr.mxu0 0.0
    %1206 = vmatpush1.msra.mxu0 0.0
    %1207 = vmatprep.subr.mxu0 0.0
    %1208 = vmatpush1.msra.mxu0 0.0
    %1209 = vmatprep.subr.mxu0 0.0
    %1210 = vmatpush1.msra.mxu0 0.0
    %1211 = vmatprep.subr.mxu0 0.0
    %1212 = vmatpush1.msra.mxu0 0.0
    %1213 = vmatprep.subr.mxu0 0.0
    %1214 = vmatpush1.msra.mxu0 0.0
    %1215 = vmatprep.subr.mxu0 0.0
    %1216 = vmatpush1.msra.mxu0 0.0
    %1217 = vmatprep.subr.mxu0 0.0
    %1218 = vmatpush1.msra.mxu0 0.0
    %1219 = vmatprep.subr.mxu0 0.0
    %1220 = vmatpush1.msra.mxu0 0.0
    %1221 = vmatprep.subr.mxu0 0.0
    %1222 = vmatpush1.msra.mxu0 0.0
    %1223 = vmatprep.subr.mxu0 0.0
    %1224 = vmatpush1.msra.mxu0 0.0
    %1225 = vmatprep.subr.mxu0 0.0
    %1226 = vmatpush1.msra.mxu0 0.0
    %1227 = vmatprep.subr.mxu0 0.0
    %1228 = vmatpush1.msra.mxu0 0.0
    %1229 = vmatprep.subr.mxu0 0.0
    %1230 = vmatpush1.msra.mxu0 0.0
    %1231 = vmatprep.subr.mxu0 0.0
    %1232 = vmatpush1.msra.mxu0 0.0
    %1233 = vmatprep.subr.mxu0 0.0
    %1234 = vmatpush1.msra.mxu0 0.0
    %1235 = vmatprep.subr.mxu0 0.0
    %1236 = vmatpush1.msra.mxu0 0.0
    %1237 = vmatprep.subr.mxu0 0.0
    %1238 = vmatpush1.msra.mxu0 0.0
    %1239 = vmatprep.subr.mxu0 0.0
    %1240 = vmatpush1.msra.mxu0 0.0
    %1241 = vmatprep.subr.mxu0 0.0
    %1242 = vmatpush1.msra.mxu0 0.0
    %1243 = vmatprep.subr.mxu0 0.0
    %1244 = vmatpush1.msra.mxu0 0.0
    %1245 = vmatprep.subr.mxu0 0.0
    %1246 = vmatpush1.msra.mxu0 0.0
    %1247 = vmatprep.mubr.f32.mxu0 0.0
    %v1248 = vand.u32 %v73, 4294901760
    %1249 = vmatmul.mubr.f32.gmra.mrb[0].mxu0 %v1248
    %v1250 = vpop.f32.mrb[0].mxu0
    %v1251 = vadd.f32 %v1164, %v1250
    %v1252 = vpop.f32.mrb[0].mxu0
    %v1253 = vadd.f32 %v1166, %v1252
    %1254 = vmatprep.mubr.f32.mxu0 0.0
    %v1255 = vand.u32 %v76, 4294901760
    %1256 = vmatmul.mubr.f32.gmra.mrb[0].mxu0 %v1255
    %v1257 = vpop.f32.mrb[0].mxu0
    %v1258 = vadd.f32 %v1171, %v1257
    %v1259 = vpop.f32.mrb[0].mxu0
    %v1260 = vadd.f32 %v1173, %v1259
    %1261 = vdwg.mxu0
    %v1263 = vsel %vm71, %v52, 0
    %v1266 = vsel %vm71, %v54, 0
    %v1268 = vand.u32 %v56, 4294901760
    %1269 = vmatprep.subr.mxu0 %v1268
    %v1270 = vand.u32 %v55, 4294901760
    %1271 = vmatpush1.msra.mxu0 %v1270
    %v1272 = vand.u32 %v60, 4294901760
    %1273 = vmatprep.subr.mxu0 %v1272
    %v1274 = vand.u32 %v59, 4294901760
    %1275 = vmatpush1.msra.mxu0 %v1274
    %v1276 = vand.u32 %v64, 4294901760
    %1277 = vmatprep.subr.mxu0 %v1276
    %v1278 = vand.u32 %v63, 4294901760
    %1279 = vmatpush1.msra.mxu0 %v1278
    %v1280 = vand.u32 %v68, 4294901760
    %1281 = vmatprep.subr.mxu0 %v1280
    %v1282 = vand.u32 %v67, 4294901760
    %1283 = vmatpush1.msra.mxu0 %v1282
    %1284 = vmatprep.subr.mxu0 0.0
    %1285 = vmatpush1.msra.mxu0 0.0
    %1286 = vmatprep.subr.mxu0 0.0
    %1287 = vmatpush1.msra.mxu0 0.0
    %1288 = vmatprep.subr.mxu0 0.0
    %1289 = vmatpush1.msra.mxu0 0.0
    %1290 = vmatprep.subr.mxu0 0.0
    %1291 = vmatpush1.msra.mxu0 0.0
    %1292 = vmatprep.subr.mxu0 0.0
    %1293 = vmatpush1.msra.mxu0 0.0
    %1294 = vmatprep.subr.mxu0 0.0
    %1295 = vmatpush1.msra.mxu0 0.0
    %1296 = vmatprep.subr.mxu0 0.0
    %1297 = vmatpush1.msra.mxu0 0.0
    %1298 = vmatprep.subr.mxu0 0.0
    %1299 = vmatpush1.msra.mxu0 0.0
    %1300 = vmatprep.subr.mxu0 0.0
    %1301 = vmatpush1.msra.mxu0 0.0
    %1302 = vmatprep.subr.mxu0 0.0
    %1303 = vmatpush1.msra.mxu0 0.0
    %1304 = vmatprep.subr.mxu0 0.0
    %1305 = vmatpush1.msra.mxu0 0.0
    %1306 = vmatprep.subr.mxu0 0.0
    %1307 = vmatpush1.msra.mxu0 0.0
    %1308 = vmatprep.subr.mxu0 0.0
    %1309 = vmatpush1.msra.mxu0 0.0
    %1310 = vmatprep.subr.mxu0 0.0
    %1311 = vmatpush1.msra.mxu0 0.0
    %1312 = vmatprep.subr.mxu0 0.0
    %1313 = vmatpush1.msra.mxu0 0.0
    %1314 = vmatprep.subr.mxu0 0.0
    %1315 = vmatpush1.msra.mxu0 0.0
    %1316 = vmatprep.subr.mxu0 0.0
    %1317 = vmatpush1.msra.mxu0 0.0
    %1318 = vmatprep.subr.mxu0 0.0
    %1319 = vmatpush1.msra.mxu0 0.0
    %1320 = vmatprep.subr.mxu0 0.0
    %1321 = vmatpush1.msra.mxu0 0.0
    %1322 = vmatprep.subr.mxu0 0.0
    %1323 = vmatpush1.msra.mxu0 0.0
    %1324 = vmatprep.subr.mxu0 0.0
    %1325 = vmatpush1.msra.mxu0 0.0
    %1326 = vmatprep.subr.mxu0 0.0
    %1327 = vmatpush1.msra.mxu0 0.0
    %1328 = vmatprep.subr.mxu0 0.0
    %1329 = vmatpush1.msra.mxu0 0.0
    %1330 = vmatprep.subr.mxu0 0.0
    %1331 = vmatpush1.msra.mxu0 0.0
    %1332 = vmatprep.subr.mxu0 0.0
    %1333 = vmatpush1.msra.mxu0 0.0
    %1334 = vmatprep.subr.mxu0 0.0
    %1335 = vmatpush1.msra.mxu0 0.0
    %1336 = vmatprep.subr.mxu0 0.0
    %1337 = vmatpush1.msra.mxu0 0.0
    %1338 = vmatprep.subr.mxu0 0.0
    %1339 = vmatpush1.msra.mxu0 0.0
    %1340 = vmatprep.mubr.f32.mxu0 0.0
    %v1341 = vand.u32 %v1263, 4294901760
    %v1342 = vsub.f32 %v1263, %v1341
    %v1343 = vand.u32 %v1342, 4294901760
    %v1344 = vsub.f32 %v1342, %v1343
    %v1345 = vand.u32 %v1344, 4294901760
    %1346 = vmatmul.mubr.f32.gmra.mrb[0].mxu0 %v1345
    %v1347 = vpop.f32.mrb[0].mxu0
    %v1348 = vadd.f32 0.0, %v1347
    %v1349 = vpop.f32.mrb[0].mxu0
    %v1350 = vadd.f32 0.0, %v1349
    %1351 = vmatprep.mubr.f32.mxu0 0.0
    %v1352 = vand.u32 %v1266, 4294901760
    %v1353 = vsub.f32 %v1266, %v1352
    %v1354 = vand.u32 %v1353, 4294901760
    %v1355 = vsub.f32 %v1353, %v1354
    %v1356 = vand.u32 %v1355, 4294901760
    %1357 = vmatmul.mubr.f32.gmra.mrb[0].mxu0 %v1356
    %v1358 = vpop.f32.mrb[0].mxu0
    %v1359 = vadd.f32 0.0, %v1358
    %v1360 = vpop.f32.mrb[0].mxu0
    %v1361 = vadd.f32 0.0, %v1360
    %1362 = vdwg.mxu0
    %v1363 = vand.u32 %v56, 4294901760
    %v1364 = vsub.f32 %v56, %v1363
    %v1365 = vand.u32 %v1364, 4294901760
    %v1366 = vsub.f32 %v1364, %v1365
    %v1367 = vand.u32 %v1366, 4294901760
    %1368 = vmatprep.subr.mxu0 %v1367
    %v1369 = vand.u32 %v55, 4294901760
    %v1370 = vsub.f32 %v55, %v1369
    %v1371 = vand.u32 %v1370, 4294901760
    %v1372 = vsub.f32 %v1370, %v1371
    %v1373 = vand.u32 %v1372, 4294901760
    %1374 = vmatpush1.msra.mxu0 %v1373
    %v1375 = vand.u32 %v60, 4294901760
    %v1376 = vsub.f32 %v60, %v1375
    %v1377 = vand.u32 %v1376, 4294901760
    %v1378 = vsub.f32 %v1376, %v1377
    %v1379 = vand.u32 %v1378, 4294901760
    %1380 = vmatprep.subr.mxu0 %v1379
    %v1381 = vand.u32 %v59, 4294901760
    %v1382 = vsub.f32 %v59, %v1381
    %v1383 = vand.u32 %v1382, 4294901760
    %v1384 = vsub.f32 %v1382, %v1383
    %v1385 = vand.u32 %v1384, 4294901760
    %1386 = vmatpush1.msra.mxu0 %v1385
    %v1387 = vand.u32 %v64, 4294901760
    %v1388 = vsub.f32 %v64, %v1387
    %v1389 = vand.u32 %v1388, 4294901760
    %v1390 = vsub.f32 %v1388, %v1389
    %v1391 = vand.u32 %v1390, 4294901760
    %1392 = vmatprep.subr.mxu0 %v1391
    %v1393 = vand.u32 %v63, 4294901760
    %v1394 = vsub.f32 %v63, %v1393
    %v1395 = vand.u32 %v1394, 4294901760
    %v1396 = vsub.f32 %v1394, %v1395
    %v1397 = vand.u32 %v1396, 4294901760
    %1398 = vmatpush1.msra.mxu0 %v1397
    %v1399 = vand.u32 %v68, 4294901760
    %v1400 = vsub.f32 %v68, %v1399
    %v1401 = vand.u32 %v1400, 4294901760
    %v1402 = vsub.f32 %v1400, %v1401
    %v1403 = vand.u32 %v1402, 4294901760
    %1404 = vmatprep.subr.mxu0 %v1403
    %v1405 = vand.u32 %v67, 4294901760
    %v1406 = vsub.f32 %v67, %v1405
    %v1407 = vand.u32 %v1406, 4294901760
    %v1408 = vsub.f32 %v1406, %v1407
    %v1409 = vand.u32 %v1408, 4294901760
    %1410 = vmatpush1.msra.mxu0 %v1409
    %1411 = vmatprep.subr.mxu0 0.0
    %1412 = vmatpush1.msra.mxu0 0.0
    %1413 = vmatprep.subr.mxu0 0.0
    %1414 = vmatpush1.msra.mxu0 0.0
    %1415 = vmatprep.subr.mxu0 0.0
    %1416 = vmatpush1.msra.mxu0 0.0
    %1417 = vmatprep.subr.mxu0 0.0
    %1418 = vmatpush1.msra.mxu0 0.0
    %1419 = vmatprep.subr.mxu0 0.0
    %1420 = vmatpush1.msra.mxu0 0.0
    %1421 = vmatprep.subr.mxu0 0.0
    %1422 = vmatpush1.msra.mxu0 0.0
    %1423 = vmatprep.subr.mxu0 0.0
    %1424 = vmatpush1.msra.mxu0 0.0
    %1425 = vmatprep.subr.mxu0 0.0
    %1426 = vmatpush1.msra.mxu0 0.0
    %1427 = vmatprep.subr.mxu0 0.0
    %1428 = vmatpush1.msra.mxu0 0.0
    %1429 = vmatprep.subr.mxu0 0.0
    %1430 = vmatpush1.msra.mxu0 0.0
    %1431 = vmatprep.subr.mxu0 0.0
    %1432 = vmatpush1.msra.mxu0 0.0
    %1433 = vmatprep.subr.mxu0 0.0
    %1434 = vmatpush1.msra.mxu0 0.0
    %1435 = vmatprep.subr.mxu0 0.0
    %1436 = vmatpush1.msra.mxu0 0.0
    %1437 = vmatprep.subr.mxu0 0.0
    %1438 = vmatpush1.msra.mxu0 0.0
    %1439 = vmatprep.subr.mxu0 0.0
    %1440 = vmatpush1.msra.mxu0 0.0
    %1441 = vmatprep.subr.mxu0 0.0
    %1442 = vmatpush1.msra.mxu0 0.0
    %1443 = vmatprep.subr.mxu0 0.0
    %1444 = vmatpush1.msra.mxu0 0.0
    %1445 = vmatprep.subr.mxu0 0.0
    %1446 = vmatpush1.msra.mxu0 0.0
    %1447 = vmatprep.subr.mxu0 0.0
    %1448 = vmatpush1.msra.mxu0 0.0
    %1449 = vmatprep.subr.mxu0 0.0
    %1450 = vmatpush1.msra.mxu0 0.0
    %1451 = vmatprep.subr.mxu0 0.0
    %1452 = vmatpush1.msra.mxu0 0.0
    %1453 = vmatprep.subr.mxu0 0.0
    %1454 = vmatpush1.msra.mxu0 0.0
    %1455 = vmatprep.subr.mxu0 0.0
    %1456 = vmatpush1.msra.mxu0 0.0
    %1457 = vmatprep.subr.mxu0 0.0
    %1458 = vmatpush1.msra.mxu0 0.0
    %1459 = vmatprep.subr.mxu0 0.0
    %1460 = vmatpush1.msra.mxu0 0.0
    %1461 = vmatprep.subr.mxu0 0.0
    %1462 = vmatpush1.msra.mxu0 0.0
    %1463 = vmatprep.subr.mxu0 0.0
    %1464 = vmatpush1.msra.mxu0 0.0
    %1465 = vmatprep.subr.mxu0 0.0
    %1466 = vmatpush1.msra.mxu0 0.0
    %1467 = vmatprep.mubr.f32.mxu0 0.0
    %v1468 = vand.u32 %v1263, 4294901760
    %1469 = vmatmul.mubr.f32.gmra.mrb[0].mxu0 %v1468
    %v1470 = vpop.f32.mrb[0].mxu0
    %v1471 = vadd.f32 %v1348, %v1470
    %v1472 = vpop.f32.mrb[0].mxu0
    %v1473 = vadd.f32 %v1350, %v1472
    %1474 = vmatprep.mubr.f32.mxu0 0.0
    %v1475 = vand.u32 %v1266, 4294901760
    %1476 = vmatmul.mubr.f32.gmra.mrb[0].mxu0 %v1475
    %v1477 = vpop.f32.mrb[0].mxu0
    %v1478 = vadd.f32 %v1359, %v1477
    %v1479 = vpop.f32.mrb[0].mxu0
    %v1480 = vadd.f32 %v1361, %v1479
    %1481 = vdwg.mxu0
    %v1482 = vand.u32 %v56, 4294901760
    %v1483 = vsub.f32 %v56, %v1482
    %1484 = vmatprep.subr.mxu0 %v1483
    %v1485 = vand.u32 %v55, 4294901760
    %v1486 = vsub.f32 %v55, %v1485
    %1487 = vmatpush1.msra.mxu0 %v1486
    %v1488 = vand.u32 %v60, 4294901760
    %v1489 = vsub.f32 %v60, %v1488
    %1490 = vmatprep.subr.mxu0 %v1489
    %v1491 = vand.u32 %v59, 4294901760
    %v1492 = vsub.f32 %v59, %v1491
    %1493 = vmatpush1.msra.mxu0 %v1492
    %v1494 = vand.u32 %v64, 4294901760
    %v1495 = vsub.f32 %v64, %v1494
    %1496 = vmatprep.subr.mxu0 %v1495
    %v1497 = vand.u32 %v63, 4294901760
    %v1498 = vsub.f32 %v63, %v1497
    %1499 = vmatpush1.msra.mxu0 %v1498
    %v1500 = vand.u32 %v68, 4294901760
    %v1501 = vsub.f32 %v68, %v1500
    %1502 = vmatprep.subr.mxu0 %v1501
    %v1503 = vand.u32 %v67, 4294901760
    %v1504 = vsub.f32 %v67, %v1503
    %1505 = vmatpush1.msra.mxu0 %v1504
    %1506 = vmatprep.subr.mxu0 0.0
    %1507 = vmatpush1.msra.mxu0 0.0
    %1508 = vmatprep.subr.mxu0 0.0
    %1509 = vmatpush1.msra.mxu0 0.0
    %1510 = vmatprep.subr.mxu0 0.0
    %1511 = vmatpush1.msra.mxu0 0.0
    %1512 = vmatprep.subr.mxu0 0.0
    %1513 = vmatpush1.msra.mxu0 0.0
    %1514 = vmatprep.subr.mxu0 0.0
    %1515 = vmatpush1.msra.mxu0 0.0
    %1516 = vmatprep.subr.mxu0 0.0
    %1517 = vmatpush1.msra.mxu0 0.0
    %1518 = vmatprep.subr.mxu0 0.0
    %1519 = vmatpush1.msra.mxu0 0.0
    %1520 = vmatprep.subr.mxu0 0.0
    %1521 = vmatpush1.msra.mxu0 0.0
    %1522 = vmatprep.subr.mxu0 0.0
    %1523 = vmatpush1.msra.mxu0 0.0
    %1524 = vmatprep.subr.mxu0 0.0
    %1525 = vmatpush1.msra.mxu0 0.0
    %1526 = vmatprep.subr.mxu0 0.0
    %1527 = vmatpush1.msra.mxu0 0.0
    %1528 = vmatprep.subr.mxu0 0.0
    %1529 = vmatpush1.msra.mxu0 0.0
    %1530 = vmatprep.subr.mxu0 0.0
    %1531 = vmatpush1.msra.mxu0 0.0
    %1532 = vmatprep.subr.mxu0 0.0
    %1533 = vmatpush1.msra.mxu0 0.0
    %1534 = vmatprep.subr.mxu0 0.0
    %1535 = vmatpush1.msra.mxu0 0.0
    %1536 = vmatprep.subr.mxu0 0.0
    %1537 = vmatpush1.msra.mxu0 0.0
    %1538 = vmatprep.subr.mxu0 0.0
    %1539 = vmatpush1.msra.mxu0 0.0
    %1540 = vmatprep.subr.mxu0 0.0
    %1541 = vmatpush1.msra.mxu0 0.0
    %1542 = vmatprep.subr.mxu0 0.0
    %1543 = vmatpush1.msra.mxu0 0.0
    %1544 = vmatprep.subr.mxu0 0.0
    %1545 = vmatpush1.msra.mxu0 0.0
    %1546 = vmatprep.subr.mxu0 0.0
    %1547 = vmatpush1.msra.mxu0 0.0
    %1548 = vmatprep.subr.mxu0 0.0
    %1549 = vmatpush1.msra.mxu0 0.0
    %1550 = vmatprep.subr.mxu0 0.0
    %1551 = vmatpush1.msra.mxu0 0.0
    %1552 = vmatprep.subr.mxu0 0.0
    %1553 = vmatpush1.msra.mxu0 0.0
    %1554 = vmatprep.subr.mxu0 0.0
    %1555 = vmatpush1.msra.mxu0 0.0
    %1556 = vmatprep.subr.mxu0 0.0
    %1557 = vmatpush1.msra.mxu0 0.0
    %1558 = vmatprep.subr.mxu0 0.0
    %1559 = vmatpush1.msra.mxu0 0.0
    %1560 = vmatprep.subr.mxu0 0.0
    %1561 = vmatpush1.msra.mxu0 0.0
    %1562 = vmatprep.mubr.f32.mxu0 0.0
    %v1563 = vand.u32 %v1263, 4294901760
    %v1564 = vsub.f32 %v1263, %v1563
    %1565 = vmatmul.mubr.f32.gmra.mrb[0].mxu0 %v1564
    %v1566 = vpop.f32.mrb[0].mxu0
    %v1567 = vadd.f32 %v1471, %v1566
    %v1568 = vpop.f32.mrb[0].mxu0
    %v1569 = vadd.f32 %v1473, %v1568
    %1570 = vmatprep.mubr.f32.mxu0 0.0
    %v1571 = vand.u32 %v1266, 4294901760
    %v1572 = vsub.f32 %v1266, %v1571
    %1573 = vmatmul.mubr.f32.gmra.mrb[0].mxu0 %v1572
    %v1574 = vpop.f32.mrb[0].mxu0
    %v1575 = vadd.f32 %v1478, %v1574
    %v1576 = vpop.f32.mrb[0].mxu0
    %v1577 = vadd.f32 %v1480, %v1576
    %1578 = vdwg.mxu0
    %v1579 = vand.u32 %v56, 4294901760
    %1580 = vmatprep.subr.mxu0 %v1579
    %v1581 = vand.u32 %v55, 4294901760
    %1582 = vmatpush1.msra.mxu0 %v1581
    %v1583 = vand.u32 %v60, 4294901760
    %1584 = vmatprep.subr.mxu0 %v1583
    %v1585 = vand.u32 %v59, 4294901760
    %1586 = vmatpush1.msra.mxu0 %v1585
    %v1587 = vand.u32 %v64, 4294901760
    %1588 = vmatprep.subr.mxu0 %v1587
    %v1589 = vand.u32 %v63, 4294901760
    %1590 = vmatpush1.msra.mxu0 %v1589
    %v1591 = vand.u32 %v68, 4294901760
    %1592 = vmatprep.subr.mxu0 %v1591
    %v1593 = vand.u32 %v67, 4294901760
    %1594 = vmatpush1.msra.mxu0 %v1593
    %1595 = vmatprep.subr.mxu0 0.0
    %1596 = vmatpush1.msra.mxu0 0.0
    %1597 = vmatprep.subr.mxu0 0.0
    %1598 = vmatpush1.msra.mxu0 0.0
    %1599 = vmatprep.subr.mxu0 0.0
    %1600 = vmatpush1.msra.mxu0 0.0
    %1601 = vmatprep.subr.mxu0 0.0
    %1602 = vmatpush1.msra.mxu0 0.0
    %1603 = vmatprep.subr.mxu0 0.0
    %1604 = vmatpush1.msra.mxu0 0.0
    %1605 = vmatprep.subr.mxu0 0.0
    %1606 = vmatpush1.msra.mxu0 0.0
    %1607 = vmatprep.subr.mxu0 0.0
    %1608 = vmatpush1.msra.mxu0 0.0
    %1609 = vmatprep.subr.mxu0 0.0
    %1610 = vmatpush1.msra.mxu0 0.0
    %1611 = vmatprep.subr.mxu0 0.0
    %1612 = vmatpush1.msra.mxu0 0.0
    %1613 = vmatprep.subr.mxu0 0.0
    %1614 = vmatpush1.msra.mxu0 0.0
    %1615 = vmatprep.subr.mxu0 0.0
    %1616 = vmatpush1.msra.mxu0 0.0
    %1617 = vmatprep.subr.mxu0 0.0
    %1618 = vmatpush1.msra.mxu0 0.0
    %1619 = vmatprep.subr.mxu0 0.0
    %1620 = vmatpush1.msra.mxu0 0.0
    %1621 = vmatprep.subr.mxu0 0.0
    %1622 = vmatpush1.msra.mxu0 0.0
    %1623 = vmatprep.subr.mxu0 0.0
    %1624 = vmatpush1.msra.mxu0 0.0
    %1625 = vmatprep.subr.mxu0 0.0
    %1626 = vmatpush1.msra.mxu0 0.0
    %1627 = vmatprep.subr.mxu0 0.0
    %1628 = vmatpush1.msra.mxu0 0.0
    %1629 = vmatprep.subr.mxu0 0.0
    %1630 = vmatpush1.msra.mxu0 0.0
    %1631 = vmatprep.subr.mxu0 0.0
    %1632 = vmatpush1.msra.mxu0 0.0
    %1633 = vmatprep.subr.mxu0 0.0
    %1634 = vmatpush1.msra.mxu0 0.0
    %1635 = vmatprep.subr.mxu0 0.0
    %1636 = vmatpush1.msra.mxu0 0.0
    %1637 = vmatprep.subr.mxu0 0.0
    %1638 = vmatpush1.msra.mxu0 0.0
    %1639 = vmatprep.subr.mxu0 0.0
    %1640 = vmatpush1.msra.mxu0 0.0
    %1641 = vmatprep.subr.mxu0 0.0
    %1642 = vmatpush1.msra.mxu0 0.0
    %1643 = vmatprep.subr.mxu0 0.0
    %1644 = vmatpush1.msra.mxu0 0.0
    %1645 = vmatprep.subr.mxu0 0.0
    %1646 = vmatpush1.msra.mxu0 0.0
    %1647 = vmatprep.subr.mxu0 0.0
    %1648 = vmatpush1.msra.mxu0 0.0
    %1649 = vmatprep.subr.mxu0 0.0
    %1650 = vmatpush1.msra.mxu0 0.0
    %1651 = vmatprep.mubr.f32.mxu0 0.0
    %v1652 = vand.u32 %v1263, 4294901760
    %v1653 = vsub.f32 %v1263, %v1652
    %v1654 = vand.u32 %v1653, 4294901760
    %1655 = vmatmul.mubr.f32.gmra.mrb[0].mxu0 %v1654
    %v1656 = vpop.f32.mrb[0].mxu0
    %v1657 = vadd.f32 %v1567, %v1656
    %v1658 = vpop.f32.mrb[0].mxu0
    %v1659 = vadd.f32 %v1569, %v1658
    %1660 = vmatprep.mubr.f32.mxu0 0.0
    %v1661 = vand.u32 %v1266, 4294901760
    %v1662 = vsub.f32 %v1266, %v1661
    %v1663 = vand.u32 %v1662, 4294901760
    %1664 = vmatmul.mubr.f32.gmra.mrb[0].mxu0 %v1663
    %v1665 = vpop.f32.mrb[0].mxu0
    %v1666 = vadd.f32 %v1575, %v1665
    %v1667 = vpop.f32.mrb[0].mxu0
    %v1668 = vadd.f32 %v1577, %v1667
    %1669 = vdwg.mxu0
    %v1670 = vand.u32 %v56, 4294901760
    %v1671 = vsub.f32 %v56, %v1670
    %v1672 = vand.u32 %v1671, 4294901760
    %1673 = vmatprep.subr.mxu0 %v1672
    %v1674 = vand.u32 %v55, 4294901760
    %v1675 = vsub.f32 %v55, %v1674
    %v1676 = vand.u32 %v1675, 4294901760
    %1677 = vmatpush1.msra.mxu0 %v1676
    %v1678 = vand.u32 %v60, 4294901760
    %v1679 = vsub.f32 %v60, %v1678
    %v1680 = vand.u32 %v1679, 4294901760
    %1681 = vmatprep.subr.mxu0 %v1680
    %v1682 = vand.u32 %v59, 4294901760
    %v1683 = vsub.f32 %v59, %v1682
    %v1684 = vand.u32 %v1683, 4294901760
    %1685 = vmatpush1.msra.mxu0 %v1684
    %v1686 = vand.u32 %v64, 4294901760
    %v1687 = vsub.f32 %v64, %v1686
    %v1688 = vand.u32 %v1687, 4294901760
    %1689 = vmatprep.subr.mxu0 %v1688
    %v1690 = vand.u32 %v63, 4294901760
    %v1691 = vsub.f32 %v63, %v1690
    %v1692 = vand.u32 %v1691, 4294901760
    %1693 = vmatpush1.msra.mxu0 %v1692
    %v1694 = vand.u32 %v68, 4294901760
    %v1695 = vsub.f32 %v68, %v1694
    %v1696 = vand.u32 %v1695, 4294901760
    %1697 = vmatprep.subr.mxu0 %v1696
    %v1698 = vand.u32 %v67, 4294901760
    %v1699 = vsub.f32 %v67, %v1698
    %v1700 = vand.u32 %v1699, 4294901760
    %1701 = vmatpush1.msra.mxu0 %v1700
    %1702 = vmatprep.subr.mxu0 0.0
    %1703 = vmatpush1.msra.mxu0 0.0
    %1704 = vmatprep.subr.mxu0 0.0
    %1705 = vmatpush1.msra.mxu0 0.0
    %1706 = vmatprep.subr.mxu0 0.0
    %1707 = vmatpush1.msra.mxu0 0.0
    %1708 = vmatprep.subr.mxu0 0.0
    %1709 = vmatpush1.msra.mxu0 0.0
    %1710 = vmatprep.subr.mxu0 0.0
    %1711 = vmatpush1.msra.mxu0 0.0
    %1712 = vmatprep.subr.mxu0 0.0
    %1713 = vmatpush1.msra.mxu0 0.0
    %1714 = vmatprep.subr.mxu0 0.0
    %1715 = vmatpush1.msra.mxu0 0.0
    %1716 = vmatprep.subr.mxu0 0.0
    %1717 = vmatpush1.msra.mxu0 0.0
    %1718 = vmatprep.subr.mxu0 0.0
    %1719 = vmatpush1.msra.mxu0 0.0
    %1720 = vmatprep.subr.mxu0 0.0
    %1721 = vmatpush1.msra.mxu0 0.0
    %1722 = vmatprep.subr.mxu0 0.0
    %1723 = vmatpush1.msra.mxu0 0.0
    %1724 = vmatprep.subr.mxu0 0.0
    %1725 = vmatpush1.msra.mxu0 0.0
    %1726 = vmatprep.subr.mxu0 0.0
    %1727 = vmatpush1.msra.mxu0 0.0
    %1728 = vmatprep.subr.mxu0 0.0
    %1729 = vmatpush1.msra.mxu0 0.0
    %1730 = vmatprep.subr.mxu0 0.0
    %1731 = vmatpush1.msra.mxu0 0.0
    %1732 = vmatprep.subr.mxu0 0.0
    %1733 = vmatpush1.msra.mxu0 0.0
    %1734 = vmatprep.subr.mxu0 0.0
    %1735 = vmatpush1.msra.mxu0 0.0
    %1736 = vmatprep.subr.mxu0 0.0
    %1737 = vmatpush1.msra.mxu0 0.0
    %1738 = vmatprep.subr.mxu0 0.0
    %1739 = vmatpush1.msra.mxu0 0.0
    %1740 = vmatprep.subr.mxu0 0.0
    %1741 = vmatpush1.msra.mxu0 0.0
    %1742 = vmatprep.subr.mxu0 0.0
    %1743 = vmatpush1.msra.mxu0 0.0
    %1744 = vmatprep.subr.mxu0 0.0
    %1745 = vmatpush1.msra.mxu0 0.0
    %1746 = vmatprep.subr.mxu0 0.0
    %1747 = vmatpush1.msra.mxu0 0.0
    %1748 = vmatprep.subr.mxu0 0.0
    %1749 = vmatpush1.msra.mxu0 0.0
    %1750 = vmatprep.subr.mxu0 0.0
    %1751 = vmatpush1.msra.mxu0 0.0
    %1752 = vmatprep.subr.mxu0 0.0
    %1753 = vmatpush1.msra.mxu0 0.0
    %1754 = vmatprep.subr.mxu0 0.0
    %1755 = vmatpush1.msra.mxu0 0.0
    %1756 = vmatprep.subr.mxu0 0.0
    %1757 = vmatpush1.msra.mxu0 0.0
    %1758 = vmatprep.mubr.f32.mxu0 0.0
    %v1759 = vand.u32 %v1263, 4294901760
    %1760 = vmatmul.mubr.f32.gmra.mrb[0].mxu0 %v1759
    %v1761 = vpop.f32.mrb[0].mxu0
    %v1762 = vadd.f32 %v1657, %v1761
    %v1763 = vpop.f32.mrb[0].mxu0
    %v1764 = vadd.f32 %v1659, %v1763
    %1765 = vmatprep.mubr.f32.mxu0 0.0
    %v1766 = vand.u32 %v1266, 4294901760
    %1767 = vmatmul.mubr.f32.gmra.mrb[0].mxu0 %v1766
    %v1768 = vpop.f32.mrb[0].mxu0
    %v1769 = vadd.f32 %v1666, %v1768
    %v1770 = vpop.f32.mrb[0].mxu0
    %v1771 = vadd.f32 %v1668, %v1770
    %1772 = vdwg.mxu0
    %v1773 = vand.u32 %v56, 4294901760
    %1774 = vmatprep.subr.mxu0 %v1773
    %v1775 = vand.u32 %v55, 4294901760
    %1776 = vmatpush1.msra.mxu0 %v1775
    %v1777 = vand.u32 %v60, 4294901760
    %1778 = vmatprep.subr.mxu0 %v1777
    %v1779 = vand.u32 %v59, 4294901760
    %1780 = vmatpush1.msra.mxu0 %v1779
    %v1781 = vand.u32 %v64, 4294901760
    %1782 = vmatprep.subr.mxu0 %v1781
    %v1783 = vand.u32 %v63, 4294901760
    %1784 = vmatpush1.msra.mxu0 %v1783
    %v1785 = vand.u32 %v68, 4294901760
    %1786 = vmatprep.subr.mxu0 %v1785
    %v1787 = vand.u32 %v67, 4294901760
    %1788 = vmatpush1.msra.mxu0 %v1787
    %1789 = vmatprep.subr.mxu0 0.0
    %1790 = vmatpush1.msra.mxu0 0.0
    %1791 = vmatprep.subr.mxu0 0.0
    %1792 = vmatpush1.msra.mxu0 0.0
    %1793 = vmatprep.subr.mxu0 0.0
    %1794 = vmatpush1.msra.mxu0 0.0
    %1795 = vmatprep.subr.mxu0 0.0
    %1796 = vmatpush1.msra.mxu0 0.0
    %1797 = vmatprep.subr.mxu0 0.0
    %1798 = vmatpush1.msra.mxu0 0.0
    %1799 = vmatprep.subr.mxu0 0.0
    %1800 = vmatpush1.msra.mxu0 0.0
    %1801 = vmatprep.subr.mxu0 0.0
    %1802 = vmatpush1.msra.mxu0 0.0
    %1803 = vmatprep.subr.mxu0 0.0
    %1804 = vmatpush1.msra.mxu0 0.0
    %1805 = vmatprep.subr.mxu0 0.0
    %1806 = vmatpush1.msra.mxu0 0.0
    %1807 = vmatprep.subr.mxu0 0.0
    %1808 = vmatpush1.msra.mxu0 0.0
    %1809 = vmatprep.subr.mxu0 0.0
    %1810 = vmatpush1.msra.mxu0 0.0
    %1811 = vmatprep.subr.mxu0 0.0
    %1812 = vmatpush1.msra.mxu0 0.0
    %1813 = vmatprep.subr.mxu0 0.0
    %1814 = vmatpush1.msra.mxu0 0.0
    %1815 = vmatprep.subr.mxu0 0.0
    %1816 = vmatpush1.msra.mxu0 0.0
    %1817 = vmatprep.subr.mxu0 0.0
    %1818 = vmatpush1.msra.mxu0 0.0
    %1819 = vmatprep.subr.mxu0 0.0
    %1820 = vmatpush1.msra.mxu0 0.0
    %1821 = vmatprep.subr.mxu0 0.0
    %1822 = vmatpush1.msra.mxu0 0.0
    %1823 = vmatprep.subr.mxu0 0.0
    %1824 = vmatpush1.msra.mxu0 0.0
    %1825 = vmatprep.subr.mxu0 0.0
    %1826 = vmatpush1.msra.mxu0 0.0
    %1827 = vmatprep.subr.mxu0 0.0
    %1828 = vmatpush1.msra.mxu0 0.0
    %1829 = vmatprep.subr.mxu0 0.0
    %1830 = vmatpush1.msra.mxu0 0.0
    %1831 = vmatprep.subr.mxu0 0.0
    %1832 = vmatpush1.msra.mxu0 0.0
    %1833 = vmatprep.subr.mxu0 0.0
    %1834 = vmatpush1.msra.mxu0 0.0
    %1835 = vmatprep.subr.mxu0 0.0
    %1836 = vmatpush1.msra.mxu0 0.0
    %1837 = vmatprep.subr.mxu0 0.0
    %1838 = vmatpush1.msra.mxu0 0.0
    %1839 = vmatprep.subr.mxu0 0.0
    %1840 = vmatpush1.msra.mxu0 0.0
    %1841 = vmatprep.subr.mxu0 0.0
    %1842 = vmatpush1.msra.mxu0 0.0
    %1843 = vmatprep.subr.mxu0 0.0
    %1844 = vmatpush1.msra.mxu0 0.0
    %1845 = vmatprep.mubr.f32.mxu0 0.0
    %v1846 = vand.u32 %v1263, 4294901760
    %1847 = vmatmul.mubr.f32.gmra.mrb[0].mxu0 %v1846
    %v1848 = vpop.f32.mrb[0].mxu0
    %v1849 = vadd.f32 %v1762, %v1848
    %v1850 = vpop.f32.mrb[0].mxu0
    %v1851 = vadd.f32 %v1764, %v1850
    %1852 = vmatprep.mubr.f32.mxu0 0.0
    %v1853 = vand.u32 %v1266, 4294901760
    %1854 = vmatmul.mubr.f32.gmra.mrb[0].mxu0 %v1853
    %v1855 = vpop.f32.mrb[0].mxu0
    %v1856 = vadd.f32 %v1769, %v1855
    %v1857 = vpop.f32.mrb[0].mxu0
    %v1858 = vadd.f32 %v1771, %v1857
    %1859 = vdwg.mxu0
    %v1860 = vand.u32 %v58, 4294901760
    %1861 = vmatprep.subr.mxu0 %v1860
    %v1862 = vand.u32 %v57, 4294901760
    %1863 = vmatpush1.msra.mxu0 %v1862
    %v1864 = vand.u32 %v62, 4294901760
    %1865 = vmatprep.subr.mxu0 %v1864
    %v1866 = vand.u32 %v61, 4294901760
    %1867 = vmatpush1.msra.mxu0 %v1866
    %v1868 = vand.u32 %v66, 4294901760
    %1869 = vmatprep.subr.mxu0 %v1868
    %v1870 = vand.u32 %v65, 4294901760
    %1871 = vmatpush1.msra.mxu0 %v1870
    %v1872 = vand.u32 %v70, 4294901760
    %1873 = vmatprep.subr.mxu0 %v1872
    %v1874 = vand.u32 %v69, 4294901760
    %1875 = vmatpush1.msra.mxu0 %v1874
    %1876 = vmatprep.subr.mxu0 0.0
    %1877 = vmatpush1.msra.mxu0 0.0
    %1878 = vmatprep.subr.mxu0 0.0
    %1879 = vmatpush1.msra.mxu0 0.0
    %1880 = vmatprep.subr.mxu0 0.0
    %1881 = vmatpush1.msra.mxu0 0.0
    %1882 = vmatprep.subr.mxu0 0.0
    %1883 = vmatpush1.msra.mxu0 0.0
    %1884 = vmatprep.subr.mxu0 0.0
    %1885 = vmatpush1.msra.mxu0 0.0
    %1886 = vmatprep.subr.mxu0 0.0
    %1887 = vmatpush1.msra.mxu0 0.0
    %1888 = vmatprep.subr.mxu0 0.0
    %1889 = vmatpush1.msra.mxu0 0.0
    %1890 = vmatprep.subr.mxu0 0.0
    %1891 = vmatpush1.msra.mxu0 0.0
    %1892 = vmatprep.subr.mxu0 0.0
    %1893 = vmatpush1.msra.mxu0 0.0
    %1894 = vmatprep.subr.mxu0 0.0
    %1895 = vmatpush1.msra.mxu0 0.0
    %1896 = vmatprep.subr.mxu0 0.0
    %1897 = vmatpush1.msra.mxu0 0.0
    %1898 = vmatprep.subr.mxu0 0.0
    %1899 = vmatpush1.msra.mxu0 0.0
    %1900 = vmatprep.subr.mxu0 0.0
    %1901 = vmatpush1.msra.mxu0 0.0
    %1902 = vmatprep.subr.mxu0 0.0
    %1903 = vmatpush1.msra.mxu0 0.0
    %1904 = vmatprep.subr.mxu0 0.0
    %1905 = vmatpush1.msra.mxu0 0.0
    %1906 = vmatprep.subr.mxu0 0.0
    %1907 = vmatpush1.msra.mxu0 0.0
    %1908 = vmatprep.subr.mxu0 0.0
    %1909 = vmatpush1.msra.mxu0 0.0
    %1910 = vmatprep.subr.mxu0 0.0
    %1911 = vmatpush1.msra.mxu0 0.0
    %1912 = vmatprep.subr.mxu0 0.0
    %1913 = vmatpush1.msra.mxu0 0.0
    %1914 = vmatprep.subr.mxu0 0.0
    %1915 = vmatpush1.msra.mxu0 0.0
    %1916 = vmatprep.subr.mxu0 0.0
    %1917 = vmatpush1.msra.mxu0 0.0
    %1918 = vmatprep.subr.mxu0 0.0
    %1919 = vmatpush1.msra.mxu0 0.0
    %1920 = vmatprep.subr.mxu0 0.0
    %1921 = vmatpush1.msra.mxu0 0.0
    %1922 = vmatprep.subr.mxu0 0.0
    %1923 = vmatpush1.msra.mxu0 0.0
    %1924 = vmatprep.subr.mxu0 0.0
    %1925 = vmatpush1.msra.mxu0 0.0
    %1926 = vmatprep.subr.mxu0 0.0
    %1927 = vmatpush1.msra.mxu0 0.0
    %1928 = vmatprep.subr.mxu0 0.0
    %1929 = vmatpush1.msra.mxu0 0.0
    %1930 = vmatprep.subr.mxu0 0.0
    %1931 = vmatpush1.msra.mxu0 0.0
    %1932 = vmatprep.mubr.f32.mxu0 0.0
    %v1933 = vand.u32 %v1263, 4294901760
    %v1934 = vsub.f32 %v1263, %v1933
    %v1935 = vand.u32 %v1934, 4294901760
    %v1936 = vsub.f32 %v1934, %v1935
    %v1937 = vand.u32 %v1936, 4294901760
    %1938 = vmatmul.mubr.f32.gmra.mrb[0].mxu0 %v1937
    %v1939 = vpop.f32.mrb[0].mxu0
    %v1940 = vadd.f32 0.0, %v1939
    %v1941 = vpop.f32.mrb[0].mxu0
    %v1942 = vadd.f32 0.0, %v1941
    %1943 = vmatprep.mubr.f32.mxu0 0.0
    %v1944 = vand.u32 %v1266, 4294901760
    %v1945 = vsub.f32 %v1266, %v1944
    %v1946 = vand.u32 %v1945, 4294901760
    %v1947 = vsub.f32 %v1945, %v1946
    %v1948 = vand.u32 %v1947, 4294901760
    %1949 = vmatmul.mubr.f32.gmra.mrb[0].mxu0 %v1948
    %v1950 = vpop.f32.mrb[0].mxu0
    %v1951 = vadd.f32 0.0, %v1950
    %v1952 = vpop.f32.mrb[0].mxu0
    %v1953 = vadd.f32 0.0, %v1952
    %1954 = vdwg.mxu0
    %v1955 = vand.u32 %v58, 4294901760
    %v1956 = vsub.f32 %v58, %v1955
    %v1957 = vand.u32 %v1956, 4294901760
    %v1958 = vsub.f32 %v1956, %v1957
    %v1959 = vand.u32 %v1958, 4294901760
    %1960 = vmatprep.subr.mxu0 %v1959
    %v1961 = vand.u32 %v57, 4294901760
    %v1962 = vsub.f32 %v57, %v1961
    %v1963 = vand.u32 %v1962, 4294901760
    %v1964 = vsub.f32 %v1962, %v1963
    %v1965 = vand.u32 %v1964, 4294901760
    %1966 = vmatpush1.msra.mxu0 %v1965
    %v1967 = vand.u32 %v62, 4294901760
    %v1968 = vsub.f32 %v62, %v1967
    %v1969 = vand.u32 %v1968, 4294901760
    %v1970 = vsub.f32 %v1968, %v1969
    %v1971 = vand.u32 %v1970, 4294901760
    %1972 = vmatprep.subr.mxu0 %v1971
    %v1973 = vand.u32 %v61, 4294901760
    %v1974 = vsub.f32 %v61, %v1973
    %v1975 = vand.u32 %v1974, 4294901760
    %v1976 = vsub.f32 %v1974, %v1975
    %v1977 = vand.u32 %v1976, 4294901760
    %1978 = vmatpush1.msra.mxu0 %v1977
    %v1979 = vand.u32 %v66, 4294901760
    %v1980 = vsub.f32 %v66, %v1979
    %v1981 = vand.u32 %v1980, 4294901760
    %v1982 = vsub.f32 %v1980, %v1981
    %v1983 = vand.u32 %v1982, 4294901760
    %1984 = vmatprep.subr.mxu0 %v1983
    %v1985 = vand.u32 %v65, 4294901760
    %v1986 = vsub.f32 %v65, %v1985
    %v1987 = vand.u32 %v1986, 4294901760
    %v1988 = vsub.f32 %v1986, %v1987
    %v1989 = vand.u32 %v1988, 4294901760
    %1990 = vmatpush1.msra.mxu0 %v1989
    %v1991 = vand.u32 %v70, 4294901760
    %v1992 = vsub.f32 %v70, %v1991
    %v1993 = vand.u32 %v1992, 4294901760
    %v1994 = vsub.f32 %v1992, %v1993
    %v1995 = vand.u32 %v1994, 4294901760
    %1996 = vmatprep.subr.mxu0 %v1995
    %v1997 = vand.u32 %v69, 4294901760
    %v1998 = vsub.f32 %v69, %v1997
    %v1999 = vand.u32 %v1998, 4294901760
    %v2000 = vsub.f32 %v1998, %v1999
    %v2001 = vand.u32 %v2000, 4294901760
    %2002 = vmatpush1.msra.mxu0 %v2001
    %2003 = vmatprep.subr.mxu0 0.0
    %2004 = vmatpush1.msra.mxu0 0.0
    %2005 = vmatprep.subr.mxu0 0.0
    %2006 = vmatpush1.msra.mxu0 0.0
    %2007 = vmatprep.subr.mxu0 0.0
    %2008 = vmatpush1.msra.mxu0 0.0
    %2009 = vmatprep.subr.mxu0 0.0
    %2010 = vmatpush1.msra.mxu0 0.0
    %2011 = vmatprep.subr.mxu0 0.0
    %2012 = vmatpush1.msra.mxu0 0.0
    %2013 = vmatprep.subr.mxu0 0.0
    %2014 = vmatpush1.msra.mxu0 0.0
    %2015 = vmatprep.subr.mxu0 0.0
    %2016 = vmatpush1.msra.mxu0 0.0
    %2017 = vmatprep.subr.mxu0 0.0
    %2018 = vmatpush1.msra.mxu0 0.0
    %2019 = vmatprep.subr.mxu0 0.0
    %2020 = vmatpush1.msra.mxu0 0.0
    %2021 = vmatprep.subr.mxu0 0.0
    %2022 = vmatpush1.msra.mxu0 0.0
    %2023 = vmatprep.subr.mxu0 0.0
    %2024 = vmatpush1.msra.mxu0 0.0
    %2025 = vmatprep.subr.mxu0 0.0
    %2026 = vmatpush1.msra.mxu0 0.0
    %2027 = vmatprep.subr.mxu0 0.0
    %2028 = vmatpush1.msra.mxu0 0.0
    %2029 = vmatprep.subr.mxu0 0.0
    %2030 = vmatpush1.msra.mxu0 0.0
    %2031 = vmatprep.subr.mxu0 0.0
    %2032 = vmatpush1.msra.mxu0 0.0
    %2033 = vmatprep.subr.mxu0 0.0
    %2034 = vmatpush1.msra.mxu0 0.0
    %2035 = vmatprep.subr.mxu0 0.0
    %2036 = vmatpush1.msra.mxu0 0.0
    %2037 = vmatprep.subr.mxu0 0.0
    %2038 = vmatpush1.msra.mxu0 0.0
    %2039 = vmatprep.subr.mxu0 0.0
    %2040 = vmatpush1.msra.mxu0 0.0
    %2041 = vmatprep.subr.mxu0 0.0
    %2042 = vmatpush1.msra.mxu0 0.0
    %2043 = vmatprep.subr.mxu0 0.0
    %2044 = vmatpush1.msra.mxu0 0.0
    %2045 = vmatprep.subr.mxu0 0.0
    %2046 = vmatpush1.msra.mxu0 0.0
    %2047 = vmatprep.subr.mxu0 0.0
    %2048 = vmatpush1.msra.mxu0 0.0
    %2049 = vmatprep.subr.mxu0 0.0
    %2050 = vmatpush1.msra.mxu0 0.0
    %2051 = vmatprep.subr.mxu0 0.0
    %2052 = vmatpush1.msra.mxu0 0.0
    %2053 = vmatprep.subr.mxu0 0.0
    %2054 = vmatpush1.msra.mxu0 0.0
    %2055 = vmatprep.subr.mxu0 0.0
    %2056 = vmatpush1.msra.mxu0 0.0
    %2057 = vmatprep.subr.mxu0 0.0
    %2058 = vmatpush1.msra.mxu0 0.0
    %2059 = vmatprep.mubr.f32.mxu0 0.0
    %v2060 = vand.u32 %v1263, 4294901760
    %2061 = vmatmul.mubr.f32.gmra.mrb[0].mxu0 %v2060
    %v2062 = vpop.f32.mrb[0].mxu0
    %v2063 = vadd.f32 %v1940, %v2062
    %v2064 = vpop.f32.mrb[0].mxu0
    %v2065 = vadd.f32 %v1942, %v2064
    %2066 = vmatprep.mubr.f32.mxu0 0.0
    %v2067 = vand.u32 %v1266, 4294901760
    %2068 = vmatmul.mubr.f32.gmra.mrb[0].mxu0 %v2067
    %v2069 = vpop.f32.mrb[0].mxu0
    %v2070 = vadd.f32 %v1951, %v2069
    %v2071 = vpop.f32.mrb[0].mxu0
    %v2072 = vadd.f32 %v1953, %v2071
    %2073 = vdwg.mxu0
    %v2074 = vand.u32 %v58, 4294901760
    %v2075 = vsub.f32 %v58, %v2074
    %2076 = vmatprep.subr.mxu0 %v2075
    %v2077 = vand.u32 %v57, 4294901760
    %v2078 = vsub.f32 %v57, %v2077
    %2079 = vmatpush1.msra.mxu0 %v2078
    %v2080 = vand.u32 %v62, 4294901760
    %v2081 = vsub.f32 %v62, %v2080
    %2082 = vmatprep.subr.mxu0 %v2081
    %v2083 = vand.u32 %v61, 4294901760
    %v2084 = vsub.f32 %v61, %v2083
    %2085 = vmatpush1.msra.mxu0 %v2084
    %v2086 = vand.u32 %v66, 4294901760
    %v2087 = vsub.f32 %v66, %v2086
    %2088 = vmatprep.subr.mxu0 %v2087
    %v2089 = vand.u32 %v65, 4294901760
    %v2090 = vsub.f32 %v65, %v2089
    %2091 = vmatpush1.msra.mxu0 %v2090
    %v2092 = vand.u32 %v70, 4294901760
    %v2093 = vsub.f32 %v70, %v2092
    %2094 = vmatprep.subr.mxu0 %v2093
    %v2095 = vand.u32 %v69, 4294901760
    %v2096 = vsub.f32 %v69, %v2095
    %2097 = vmatpush1.msra.mxu0 %v2096
    %2098 = vmatprep.subr.mxu0 0.0
    %2099 = vmatpush1.msra.mxu0 0.0
    %2100 = vmatprep.subr.mxu0 0.0
    %2101 = vmatpush1.msra.mxu0 0.0
    %2102 = vmatprep.subr.mxu0 0.0
    %2103 = vmatpush1.msra.mxu0 0.0
    %2104 = vmatprep.subr.mxu0 0.0
    %2105 = vmatpush1.msra.mxu0 0.0
    %2106 = vmatprep.subr.mxu0 0.0
    %2107 = vmatpush1.msra.mxu0 0.0
    %2108 = vmatprep.subr.mxu0 0.0
    %2109 = vmatpush1.msra.mxu0 0.0
    %2110 = vmatprep.subr.mxu0 0.0
    %2111 = vmatpush1.msra.mxu0 0.0
    %2112 = vmatprep.subr.mxu0 0.0
    %2113 = vmatpush1.msra.mxu0 0.0
    %2114 = vmatprep.subr.mxu0 0.0
    %2115 = vmatpush1.msra.mxu0 0.0
    %2116 = vmatprep.subr.mxu0 0.0
    %2117 = vmatpush1.msra.mxu0 0.0
    %2118 = vmatprep.subr.mxu0 0.0
    %2119 = vmatpush1.msra.mxu0 0.0
    %2120 = vmatprep.subr.mxu0 0.0
    %2121 = vmatpush1.msra.mxu0 0.0
    %2122 = vmatprep.subr.mxu0 0.0
    %2123 = vmatpush1.msra.mxu0 0.0
    %2124 = vmatprep.subr.mxu0 0.0
    %2125 = vmatpush1.msra.mxu0 0.0
    %2126 = vmatprep.subr.mxu0 0.0
    %2127 = vmatpush1.msra.mxu0 0.0
    %2128 = vmatprep.subr.mxu0 0.0
    %2129 = vmatpush1.msra.mxu0 0.0
    %2130 = vmatprep.subr.mxu0 0.0
    %2131 = vmatpush1.msra.mxu0 0.0
    %2132 = vmatprep.subr.mxu0 0.0
    %2133 = vmatpush1.msra.mxu0 0.0
    %2134 = vmatprep.subr.mxu0 0.0
    %2135 = vmatpush1.msra.mxu0 0.0
    %2136 = vmatprep.subr.mxu0 0.0
    %2137 = vmatpush1.msra.mxu0 0.0
    %2138 = vmatprep.subr.mxu0 0.0
    %2139 = vmatpush1.msra.mxu0 0.0
    %2140 = vmatprep.subr.mxu0 0.0
    %2141 = vmatpush1.msra.mxu0 0.0
    %2142 = vmatprep.subr.mxu0 0.0
    %2143 = vmatpush1.msra.mxu0 0.0
    %2144 = vmatprep.subr.mxu0 0.0
    %2145 = vmatpush1.msra.mxu0 0.0
    %2146 = vmatprep.subr.mxu0 0.0
    %2147 = vmatpush1.msra.mxu0 0.0
    %2148 = vmatprep.subr.mxu0 0.0
    %2149 = vmatpush1.msra.mxu0 0.0
    %2150 = vmatprep.subr.mxu0 0.0
    %2151 = vmatpush1.msra.mxu0 0.0
    %2152 = vmatprep.subr.mxu0 0.0
    %2153 = vmatpush1.msra.mxu0 0.0
    %2154 = vmatprep.mubr.f32.mxu0 0.0
    %v2155 = vand.u32 %v1263, 4294901760
    %v2156 = vsub.f32 %v1263, %v2155
    %2157 = vmatmul.mubr.f32.gmra.mrb[0].mxu0 %v2156
    %v2158 = vpop.f32.mrb[0].mxu0
    %v2159 = vadd.f32 %v2063, %v2158
    %v2160 = vpop.f32.mrb[0].mxu0
    %v2161 = vadd.f32 %v2065, %v2160
    %2162 = vmatprep.mubr.f32.mxu0 0.0
    %v2163 = vand.u32 %v1266, 4294901760
    %v2164 = vsub.f32 %v1266, %v2163
    %2165 = vmatmul.mubr.f32.gmra.mrb[0].mxu0 %v2164
    %v2166 = vpop.f32.mrb[0].mxu0
    %v2167 = vadd.f32 %v2070, %v2166
    %v2168 = vpop.f32.mrb[0].mxu0
    %v2169 = vadd.f32 %v2072, %v2168
    %2170 = vdwg.mxu0
    %v2171 = vand.u32 %v58, 4294901760
    %2172 = vmatprep.subr.mxu0 %v2171
    %v2173 = vand.u32 %v57, 4294901760
    %2174 = vmatpush1.msra.mxu0 %v2173
    %v2175 = vand.u32 %v62, 4294901760
    %2176 = vmatprep.subr.mxu0 %v2175
    %v2177 = vand.u32 %v61, 4294901760
    %2178 = vmatpush1.msra.mxu0 %v2177
    %v2179 = vand.u32 %v66, 4294901760
    %2180 = vmatprep.subr.mxu0 %v2179
    %v2181 = vand.u32 %v65, 4294901760
    %2182 = vmatpush1.msra.mxu0 %v2181
    %v2183 = vand.u32 %v70, 4294901760
    %2184 = vmatprep.subr.mxu0 %v2183
    %v2185 = vand.u32 %v69, 4294901760
    %2186 = vmatpush1.msra.mxu0 %v2185
    %2187 = vmatprep.subr.mxu0 0.0
    %2188 = vmatpush1.msra.mxu0 0.0
    %2189 = vmatprep.subr.mxu0 0.0
    %2190 = vmatpush1.msra.mxu0 0.0
    %2191 = vmatprep.subr.mxu0 0.0
    %2192 = vmatpush1.msra.mxu0 0.0
    %2193 = vmatprep.subr.mxu0 0.0
    %2194 = vmatpush1.msra.mxu0 0.0
    %2195 = vmatprep.subr.mxu0 0.0
    %2196 = vmatpush1.msra.mxu0 0.0
    %2197 = vmatprep.subr.mxu0 0.0
    %2198 = vmatpush1.msra.mxu0 0.0
    %2199 = vmatprep.subr.mxu0 0.0
    %2200 = vmatpush1.msra.mxu0 0.0
    %2201 = vmatprep.subr.mxu0 0.0
    %2202 = vmatpush1.msra.mxu0 0.0
    %2203 = vmatprep.subr.mxu0 0.0
    %2204 = vmatpush1.msra.mxu0 0.0
    %2205 = vmatprep.subr.mxu0 0.0
    %2206 = vmatpush1.msra.mxu0 0.0
    %2207 = vmatprep.subr.mxu0 0.0
    %2208 = vmatpush1.msra.mxu0 0.0
    %2209 = vmatprep.subr.mxu0 0.0
    %2210 = vmatpush1.msra.mxu0 0.0
    %2211 = vmatprep.subr.mxu0 0.0
    %2212 = vmatpush1.msra.mxu0 0.0
    %2213 = vmatprep.subr.mxu0 0.0
    %2214 = vmatpush1.msra.mxu0 0.0
    %2215 = vmatprep.subr.mxu0 0.0
    %2216 = vmatpush1.msra.mxu0 0.0
    %2217 = vmatprep.subr.mxu0 0.0
    %2218 = vmatpush1.msra.mxu0 0.0
    %2219 = vmatprep.subr.mxu0 0.0
    %2220 = vmatpush1.msra.mxu0 0.0
    %2221 = vmatprep.subr.mxu0 0.0
    %2222 = vmatpush1.msra.mxu0 0.0
    %2223 = vmatprep.subr.mxu0 0.0
    %2224 = vmatpush1.msra.mxu0 0.0
    %2225 = vmatprep.subr.mxu0 0.0
    %2226 = vmatpush1.msra.mxu0 0.0
    %2227 = vmatprep.subr.mxu0 0.0
    %2228 = vmatpush1.msra.mxu0 0.0
    %2229 = vmatprep.subr.mxu0 0.0
    %2230 = vmatpush1.msra.mxu0 0.0
    %2231 = vmatprep.subr.mxu0 0.0
    %2232 = vmatpush1.msra.mxu0 0.0
    %2233 = vmatprep.subr.mxu0 0.0
    %2234 = vmatpush1.msra.mxu0 0.0
    %2235 = vmatprep.subr.mxu0 0.0
    %2236 = vmatpush1.msra.mxu0 0.0
    %2237 = vmatprep.subr.mxu0 0.0
    %2238 = vmatpush1.msra.mxu0 0.0
    %2239 = vmatprep.subr.mxu0 0.0
    %2240 = vmatpush1.msra.mxu0 0.0
    %2241 = vmatprep.subr.mxu0 0.0
    %2242 = vmatpush1.msra.mxu0 0.0
    %2243 = vmatprep.mubr.f32.mxu0 0.0
    %v2244 = vand.u32 %v1263, 4294901760
    %v2245 = vsub.f32 %v1263, %v2244
    %v2246 = vand.u32 %v2245, 4294901760
    %2247 = vmatmul.mubr.f32.gmra.mrb[0].mxu0 %v2246
    %v2248 = vpop.f32.mrb[0].mxu0
    %v2249 = vadd.f32 %v2159, %v2248
    %v2250 = vpop.f32.mrb[0].mxu0
    %v2251 = vadd.f32 %v2161, %v2250
    %2252 = vmatprep.mubr.f32.mxu0 0.0
    %v2253 = vand.u32 %v1266, 4294901760
    %v2254 = vsub.f32 %v1266, %v2253
    %v2255 = vand.u32 %v2254, 4294901760
    %2256 = vmatmul.mubr.f32.gmra.mrb[0].mxu0 %v2255
    %v2257 = vpop.f32.mrb[0].mxu0
    %v2258 = vadd.f32 %v2167, %v2257
    %v2259 = vpop.f32.mrb[0].mxu0
    %v2260 = vadd.f32 %v2169, %v2259
    %2261 = vdwg.mxu0
    %v2262 = vand.u32 %v58, 4294901760
    %v2263 = vsub.f32 %v58, %v2262
    %v2264 = vand.u32 %v2263, 4294901760
    %2265 = vmatprep.subr.mxu0 %v2264
    %v2266 = vand.u32 %v57, 4294901760
    %v2267 = vsub.f32 %v57, %v2266
    %v2268 = vand.u32 %v2267, 4294901760
    %2269 = vmatpush1.msra.mxu0 %v2268
    %v2270 = vand.u32 %v62, 4294901760
    %v2271 = vsub.f32 %v62, %v2270
    %v2272 = vand.u32 %v2271, 4294901760
    %2273 = vmatprep.subr.mxu0 %v2272
    %v2274 = vand.u32 %v61, 4294901760
    %v2275 = vsub.f32 %v61, %v2274
    %v2276 = vand.u32 %v2275, 4294901760
    %2277 = vmatpush1.msra.mxu0 %v2276
    %v2278 = vand.u32 %v66, 4294901760
    %v2279 = vsub.f32 %v66, %v2278
    %v2280 = vand.u32 %v2279, 4294901760
    %2281 = vmatprep.subr.mxu0 %v2280
    %v2282 = vand.u32 %v65, 4294901760
    %v2283 = vsub.f32 %v65, %v2282
    %v2284 = vand.u32 %v2283, 4294901760
    %2285 = vmatpush1.msra.mxu0 %v2284
    %v2286 = vand.u32 %v70, 4294901760
    %v2287 = vsub.f32 %v70, %v2286
    %v2288 = vand.u32 %v2287, 4294901760
    %2289 = vmatprep.subr.mxu0 %v2288
    %v2290 = vand.u32 %v69, 4294901760
    %v2291 = vsub.f32 %v69, %v2290
    %v2292 = vand.u32 %v2291, 4294901760
    %2293 = vmatpush1.msra.mxu0 %v2292
    %2294 = vmatprep.subr.mxu0 0.0
    %2295 = vmatpush1.msra.mxu0 0.0
    %2296 = vmatprep.subr.mxu0 0.0
    %2297 = vmatpush1.msra.mxu0 0.0
    %2298 = vmatprep.subr.mxu0 0.0
    %2299 = vmatpush1.msra.mxu0 0.0
    %2300 = vmatprep.subr.mxu0 0.0
    %2301 = vmatpush1.msra.mxu0 0.0
    %2302 = vmatprep.subr.mxu0 0.0
    %2303 = vmatpush1.msra.mxu0 0.0
    %2304 = vmatprep.subr.mxu0 0.0
    %2305 = vmatpush1.msra.mxu0 0.0
    %2306 = vmatprep.subr.mxu0 0.0
    %2307 = vmatpush1.msra.mxu0 0.0
    %2308 = vmatprep.subr.mxu0 0.0
    %2309 = vmatpush1.msra.mxu0 0.0
    %2310 = vmatprep.subr.mxu0 0.0
    %2311 = vmatpush1.msra.mxu0 0.0
    %2312 = vmatprep.subr.mxu0 0.0
    %2313 = vmatpush1.msra.mxu0 0.0
    %2314 = vmatprep.subr.mxu0 0.0
    %2315 = vmatpush1.msra.mxu0 0.0
    %2316 = vmatprep.subr.mxu0 0.0
    %2317 = vmatpush1.msra.mxu0 0.0
    %2318 = vmatprep.subr.mxu0 0.0
    %2319 = vmatpush1.msra.mxu0 0.0
    %2320 = vmatprep.subr.mxu0 0.0
    %2321 = vmatpush1.msra.mxu0 0.0
    %2322 = vmatprep.subr.mxu0 0.0
    %2323 = vmatpush1.msra.mxu0 0.0
    %2324 = vmatprep.subr.mxu0 0.0
    %2325 = vmatpush1.msra.mxu0 0.0
    %2326 = vmatprep.subr.mxu0 0.0
    %2327 = vmatpush1.msra.mxu0 0.0
    %2328 = vmatprep.subr.mxu0 0.0
    %2329 = vmatpush1.msra.mxu0 0.0
    %2330 = vmatprep.subr.mxu0 0.0
    %2331 = vmatpush1.msra.mxu0 0.0
    %2332 = vmatprep.subr.mxu0 0.0
    %2333 = vmatpush1.msra.mxu0 0.0
    %2334 = vmatprep.subr.mxu0 0.0
    %2335 = vmatpush1.msra.mxu0 0.0
    %2336 = vmatprep.subr.mxu0 0.0
    %2337 = vmatpush1.msra.mxu0 0.0
    %2338 = vmatprep.subr.mxu0 0.0
    %2339 = vmatpush1.msra.mxu0 0.0
    %2340 = vmatprep.subr.mxu0 0.0
    %2341 = vmatpush1.msra.mxu0 0.0
    %2342 = vmatprep.subr.mxu0 0.0
    %2343 = vmatpush1.msra.mxu0 0.0
    %2344 = vmatprep.subr.mxu0 0.0
    %2345 = vmatpush1.msra.mxu0 0.0
    %2346 = vmatprep.subr.mxu0 0.0
    %2347 = vmatpush1.msra.mxu0 0.0
    %2348 = vmatprep.subr.mxu0 0.0
    %2349 = vmatpush1.msra.mxu0 0.0
    %2350 = vmatprep.mubr.f32.mxu0 0.0
    %v2351 = vand.u32 %v1263, 4294901760
    %2352 = vmatmul.mubr.f32.gmra.mrb[0].mxu0 %v2351
    %v2353 = vpop.f32.mrb[0].mxu0
    %v2354 = vadd.f32 %v2249, %v2353
    %v2355 = vpop.f32.mrb[0].mxu0
    %v2356 = vadd.f32 %v2251, %v2355
    %2357 = vmatprep.mubr.f32.mxu0 0.0
    %v2358 = vand.u32 %v1266, 4294901760
    %2359 = vmatmul.mubr.f32.gmra.mrb[0].mxu0 %v2358
    %v2360 = vpop.f32.mrb[0].mxu0
    %v2361 = vadd.f32 %v2258, %v2360
    %v2362 = vpop.f32.mrb[0].mxu0
    %v2363 = vadd.f32 %v2260, %v2362
    %2364 = vdwg.mxu0
    %v2365 = vand.u32 %v58, 4294901760
    %2366 = vmatprep.subr.mxu0 %v2365
    %v2367 = vand.u32 %v57, 4294901760
    %2368 = vmatpush1.msra.mxu0 %v2367
    %v2369 = vand.u32 %v62, 4294901760
    %2370 = vmatprep.subr.mxu0 %v2369
    %v2371 = vand.u32 %v61, 4294901760
    %2372 = vmatpush1.msra.mxu0 %v2371
    %v2373 = vand.u32 %v66, 4294901760
    %2374 = vmatprep.subr.mxu0 %v2373
    %v2375 = vand.u32 %v65, 4294901760
    %2376 = vmatpush1.msra.mxu0 %v2375
    %v2377 = vand.u32 %v70, 4294901760
    %2378 = vmatprep.subr.mxu0 %v2377
    %v2379 = vand.u32 %v69, 4294901760
    %2380 = vmatpush1.msra.mxu0 %v2379
    %2381 = vmatprep.subr.mxu0 0.0
    %2382 = vmatpush1.msra.mxu0 0.0
    %2383 = vmatprep.subr.mxu0 0.0
    %2384 = vmatpush1.msra.mxu0 0.0
    %2385 = vmatprep.subr.mxu0 0.0
    %2386 = vmatpush1.msra.mxu0 0.0
    %2387 = vmatprep.subr.mxu0 0.0
    %2388 = vmatpush1.msra.mxu0 0.0
    %2389 = vmatprep.subr.mxu0 0.0
    %2390 = vmatpush1.msra.mxu0 0.0
    %2391 = vmatprep.subr.mxu0 0.0
    %2392 = vmatpush1.msra.mxu0 0.0
    %2393 = vmatprep.subr.mxu0 0.0
    %2394 = vmatpush1.msra.mxu0 0.0
    %2395 = vmatprep.subr.mxu0 0.0
    %2396 = vmatpush1.msra.mxu0 0.0
    %2397 = vmatprep.subr.mxu0 0.0
    %2398 = vmatpush1.msra.mxu0 0.0
    %2399 = vmatprep.subr.mxu0 0.0
    %2400 = vmatpush1.msra.mxu0 0.0
    %2401 = vmatprep.subr.mxu0 0.0
    %2402 = vmatpush1.msra.mxu0 0.0
    %2403 = vmatprep.subr.mxu0 0.0
    %2404 = vmatpush1.msra.mxu0 0.0
    %2405 = vmatprep.subr.mxu0 0.0
    %2406 = vmatpush1.msra.mxu0 0.0
    %2407 = vmatprep.subr.mxu0 0.0
    %2408 = vmatpush1.msra.mxu0 0.0
    %2409 = vmatprep.subr.mxu0 0.0
    %2410 = vmatpush1.msra.mxu0 0.0
    %2411 = vmatprep.subr.mxu0 0.0
    %2412 = vmatpush1.msra.mxu0 0.0
    %2413 = vmatprep.subr.mxu0 0.0
    %2414 = vmatpush1.msra.mxu0 0.0
    %2415 = vmatprep.subr.mxu0 0.0
    %2416 = vmatpush1.msra.mxu0 0.0
    %2417 = vmatprep.subr.mxu0 0.0
    %2418 = vmatpush1.msra.mxu0 0.0
    %2419 = vmatprep.subr.mxu0 0.0
    %2420 = vmatpush1.msra.mxu0 0.0
    %2421 = vmatprep.subr.mxu0 0.0
    %2422 = vmatpush1.msra.mxu0 0.0
    %2423 = vmatprep.subr.mxu0 0.0
    %2424 = vmatpush1.msra.mxu0 0.0
    %2425 = vmatprep.subr.mxu0 0.0
    %2426 = vmatpush1.msra.mxu0 0.0
    %2427 = vmatprep.subr.mxu0 0.0
    %2428 = vmatpush1.msra.mxu0 0.0
    %2429 = vmatprep.subr.mxu0 0.0
    %2430 = vmatpush1.msra.mxu0 0.0
    %2431 = vmatprep.subr.mxu0 0.0
    %2432 = vmatpush1.msra.mxu0 0.0
    %2433 = vmatprep.subr.mxu0 0.0
    %2434 = vmatpush1.msra.mxu0 0.0
    %2435 = vmatprep.subr.mxu0 0.0
    %2436 = vmatpush1.msra.mxu0 0.0
    %2437 = vmatprep.mubr.f32.mxu0 0.0
    %v2438 = vand.u32 %v1263, 4294901760
    %2439 = vmatmul.mubr.f32.gmra.mrb[0].mxu0 %v2438
    %v2440 = vpop.f32.mrb[0].mxu0
    %v2441 = vadd.f32 %v2354, %v2440
    %v2442 = vpop.f32.mrb[0].mxu0
    %v2443 = vadd.f32 %v2356, %v2442
    %2444 = vmatprep.mubr.f32.mxu0 0.0
    %v2445 = vand.u32 %v1266, 4294901760
    %2446 = vmatmul.mubr.f32.gmra.mrb[0].mxu0 %v2445
    %v2447 = vpop.f32.mrb[0].mxu0
    %v2448 = vadd.f32 %v2361, %v2447
    %v2449 = vpop.f32.mrb[0].mxu0
    %v2450 = vadd.f32 %v2363, %v2449
    %2451 = vdwg.mxu0
    %v2452 = vld [vmem:[%s2] sm:$0xf]
    %v2454 = vlaneseq
    %v2455 = vshrl.u32 %v2454, 7
    %v2456 = vsub.s32 0, %v2455
    %v2457 = vrot.slane %v2452, %v2456
    %v2458 = vlaneseq
    %v2459 = vshrl.u32 %v2458, 7
    %v2460 = vsub.s32 1, %v2459
    %v2461 = vrot.slane %v2452, %v2460
    %v2462 = vlaneseq
    %v2463 = vshrl.u32 %v2462, 7
    %v2464 = vsub.s32 2, %v2463
    %v2465 = vrot.slane %v2452, %v2464
    %v2466 = vlaneseq
    %v2467 = vshrl.u32 %v2466, 7
    %v2468 = vsub.s32 3, %v2467
    %v2469 = vrot.slane %v2452, %v2468
    %v2474 = vmul.f32 %v1849, %v2457
    %v2475 = vmul.f32 %v1851, %v2461
    %v2476 = vmul.f32 %v2441, %v2465
    %v2477 = vmul.f32 %v2443, %v2469
    %v2478 = vmul.f32 %v1856, %v2457
    %v2479 = vmul.f32 %v1858, %v2461
    %v2480 = vmul.f32 %v2448, %v2465
    %v2481 = vmul.f32 %v2450, %v2469
    %v2482 = vld [vmem:[%s3] sm:$0xf]
    %v2484 = vlaneseq
    %v2485 = vshrl.u32 %v2484, 7
    %v2486 = vsub.s32 0, %v2485
    %v2487 = vrot.slane %v2482, %v2486
    %v2488 = vlaneseq
    %v2489 = vshrl.u32 %v2488, 7
    %v2490 = vsub.s32 1, %v2489
    %v2491 = vrot.slane %v2482, %v2490
    %v2492 = vlaneseq
    %v2493 = vshrl.u32 %v2492, 7
    %v2494 = vsub.s32 2, %v2493
    %v2495 = vrot.slane %v2482, %v2494
    %v2496 = vlaneseq
    %v2497 = vshrl.u32 %v2496, 7
    %v2498 = vsub.s32 3, %v2497
    %v2499 = vrot.slane %v2482, %v2498
    %v2504 = vmul.f32 %v659, %v2487
    %v2505 = vmul.f32 %v661, %v2491
    %v2506 = vmul.f32 %v1251, %v2495
    %v2507 = vmul.f32 %v1253, %v2499
    %v2508 = vmul.f32 %v666, %v2487
    %v2509 = vmul.f32 %v668, %v2491
    %v2510 = vmul.f32 %v1258, %v2495
    %v2511 = vmul.f32 %v1260, %v2499
    %v2512 = vsub.f32 %v2474, %v2504
    %v2513 = vsub.f32 %v2475, %v2505
    %v2514 = vsub.f32 %v2476, %v2506
    %v2515 = vsub.f32 %v2477, %v2507
    %v2516 = vsub.f32 %v2478, %v2508
    %v2517 = vsub.f32 %v2479, %v2509
    %v2518 = vsub.f32 %v2480, %v2510
    %v2519 = vsub.f32 %v2481, %v2511
    %v2520 = vld [vmem:[%s4] sm:$0xf]
    %v2522 = vlaneseq
    %v2523 = vshrl.u32 %v2522, 7
    %v2524 = vsub.s32 0, %v2523
    %v2525 = vrot.slane %v2520, %v2524
    %v2526 = vlaneseq
    %v2527 = vshrl.u32 %v2526, 7
    %v2528 = vsub.s32 1, %v2527
    %v2529 = vrot.slane %v2520, %v2528
    %v2530 = vlaneseq
    %v2531 = vshrl.u32 %v2530, 7
    %v2532 = vsub.s32 2, %v2531
    %v2533 = vrot.slane %v2520, %v2532
    %v2534 = vlaneseq
    %v2535 = vshrl.u32 %v2534, 7
    %v2536 = vsub.s32 3, %v2535
    %v2537 = vrot.slane %v2520, %v2536
    %v2542 = vadd.f32 %v2512, %v2525
    %v2543 = vadd.f32 %v2513, %v2529
    %v2544 = vadd.f32 %v2514, %v2533
    %v2545 = vadd.f32 %v2515, %v2537
    %v2546 = vadd.f32 %v2516, %v2525
    %v2547 = vadd.f32 %v2517, %v2529
    %v2548 = vadd.f32 %v2518, %v2533
    %v2549 = vadd.f32 %v2519, %v2537
    %2550 = vst [vmem:[#allocation7] sm:$0xff] %v2542
    %2551 = vst [vmem:[#allocation7 + $0x8] sm:$0xff] %v2543
    %2552 = vst [vmem:[#allocation7 + $0x10] sm:$0xff] %v2544
    %2553 = vst [vmem:[#allocation7 + $0x18] sm:$0xff] %v2545
    %2554 = vst [vmem:[#allocation7 + $0x20] sm:$0xff] %v2546
    %2555 = vst [vmem:[#allocation7 + $0x28] sm:$0xff] %v2547
    %2556 = vst [vmem:[#allocation7 + $0x30] sm:$0xff] %v2548
    %2557 = vst [vmem:[#allocation7 + $0x38] sm:$0xff] %v2549
    // Predicated region
    $region30: #{tpu_custom_call.1} parent=1 // pred_check
      _
    $region31: #{tpu_custom_call.1} parent=1 // pred_check_branch
      %2559 = sbr.rel (0) target = $region33
    $region32: #{tpu_custom_call.1} parent=1 // pred_region
      %s2561 = ssub.s32 1024, 1024
      %2562 = vsyncadd [#allocation4], %s2561
      %s2563 = sshll.u32 [#allocation7], 4
      %s2564 = int_to_ptr.vmem [resolvable:$true] %s2563
      %2569 = dma.vmem_to_hbm [thread:$0]  %s2564, 1024, %s5, [#allocation4], 512, 512, 32
    $region33: #{tpu_custom_call.1} parent=1 // pred_fallthru
      _
    // Predicated region
    $region34: #{tpu_custom_call.1} parent=1 // pred_check
      _
    $region35: #{tpu_custom_call.1} parent=1 // pred_check_branch
      %2571 = sbr.rel (0) target = $region37
    $region36: #{tpu_custom_call.1} parent=1 // pred_region
      %2572 = dma.done [#allocation4], 1024
    $region37: #{tpu_custom_call.1} parent=1 // pred_fallthru
      _
    %2573 = vsyncpa [#allocation3], 1
    %2574 = vsyncpa [#allocation6], 1
    %2575 = vsyncpa [#allocation4], 1

</llo_original>
